<compile_context>
chip_gen: v7x
topology: tpu7x:2x2x1
jax: 0.10.0
libtpu: 0.0.40
codegen_flags: <defaults>
</compile_context>

<pallas_src>
import jax
import jax.numpy as jnp
from jax.experimental import pallas as pl
from jax.experimental.pallas import tpu as pltpu


def _round_up(x, m):
    return (x + m - 1) // m * m


def _vmem_limit_bytes():
    """Budget scoped VMEM from the chip's physical capacity (64 MiB v7x, 128 MiB v5e/v6e)."""
    try:
        cap = int(pltpu.get_tpu_info().vmem_capacity_bytes)
    except Exception:
        cap = 64 * 1024 * 1024
    return int(max(32 * 1024 * 1024, min(cap * 3 // 4, 100 * 1024 * 1024)))


def _pinned_spec(block_shape, index_map):
    """BlockSpec for a constant-index block: single-buffer it to save VMEM."""
    try:
        return pl.BlockSpec(block_shape, index_map, pipeline_mode=pl.Buffered(1))
    except Exception:  # pipeline_mode / Buffered unavailable -> default double buffering
        return pl.BlockSpec(block_shape, index_map)


# -----------------------------------------------------------------------------
# Pass 1: tiled matmul (= 3x3 conv via im2col) with K reduction + BN partial stats
# -----------------------------------------------------------------------------
def _matmul_stats_kernel(cols_ref, w_ref, y_ref, stats_ref, acc_ref):
    # cols_ref : (TM, TK) bf16   one (M, K) tile of im2col'd patches
    # w_ref    : (TK, Cp) bf16   one K-slice of the weights
    # y_ref    : (TM, Cp) bf16   pre-BN conv output tile (written at last K step)
    # stats_ref: (8, Cp)  f32    row 0 = sum(y), row 1 = sum(y*y); rows 2..7 unused
    # acc_ref  : (TM, Cp) f32    VMEM accumulator, resident across the K axis
    k = pl.program_id(1)

    @pl.when(k == 0)
    def _():
        acc_ref[...] = jnp.zeros_like(acc_ref)

    acc_ref[...] += jnp.dot(cols_ref[...], w_ref[...],
                            preferred_element_type=jnp.float32)

    @pl.when(k == pl.num_programs(1) - 1)
    def _():
        y = acc_ref[...]                                    # f32
        y_ref[...] = y.astype(y_ref.dtype)                  # bf16 intermediate
        stats_ref[0:1, :] = jnp.sum(y, axis=0, keepdims=True)
        stats_ref[1:2, :] = jnp.sum(y * y, axis=0, keepdims=True)


# -----------------------------------------------------------------------------
# Pass 2: tiled normalize (folded BN scale/shift) + ReLU  (purely HBM-bound)
# -----------------------------------------------------------------------------
def _bn_relu_kernel(y_ref, scale_ref, shift_ref, o_ref):
    # y_ref: (TM2, Cp) bf16; scale/shift: (1, Cp) f32 pinned; o_ref: (TM2, Cp)
    y = y_ref[...].astype(jnp.float32) * scale_ref[...] + shift_ref[...]
    o_ref[...] = jnp.maximum(y, 0.0).astype(o_ref.dtype)


def _conv3x3_bn_relu(sources, w_hwio, gamma, beta, *, out_dtype,
                     block_m=1024, eps=1e-5):
    """3x3 conv (pad=1, stride=1) + BatchNorm(training stats) + ReLU.

    `sources` is a tuple of NHWC arrays that are implicitly concatenated along
    channels, so the skip-connection concat is folded into the tap build and
    never materialized.  The conv bias is dropped: BatchNorm's batch-mean
    subtraction cancels any per-channel constant exactly (training mode).
    """
    N, H, W = sources[0].shape[:3]
    Cin = sum(s.shape[-1] for s in sources)
    Cout = w_hwio.shape[-1]

    M = N * H * W
    K = 9 * Cin
    Cp = _round_up(Cout, 128)                 # lane-dense output width
    TK = min(512, _round_up(K, 128))          # K tile (multiple of 128)
    Kp = _round_up(K, TK)
    GK = Kp // TK

    TM = min(block_m, _round_up(M, 8))
    if TM >= M and M > 8:
        TM = _round_up((M + 1) // 2, 8)       # >=2 M tiles: both v7x TCs get work
    Mp = _round_up(M, TM)
    GM = Mp // TM

    # --- im2col glue (pure layout, XLA): (Mp, Kp) bf16, tap order (ky, kx, src, c) ---
    srcs = [jnp.pad(s.astype(jnp.bfloat16), ((0, 0), (1, 1), (1, 1), (0, 0)))
            for s in sources]
    taps = [sp[:, ky:ky + H, kx:kx + W, :]
            for ky in range(3) for kx in range(3) for sp in srcs]
    if Kp > K:
        taps.append(jnp.zeros((N, H, W, Kp - K), jnp.bfloat16))
    cols = jnp.concatenate(taps, axis=-1).reshape(M, Kp)
    if Mp > M:
        cols = jnp.concatenate([cols, jnp.zeros((Mp - M, Kp), jnp.bfloat16)], axis=0)

    w_mat = w_hwio.reshape(K, Cout).astype(jnp.bfloat16)
    w_mat = jnp.pad(w_mat, ((0, Kp - K), (0, Cp - Cout)))

    vmem_limit = _vmem_limit_bytes()

    # ---------------- pass 1: matmul (K-reduction axis) + per-tile BN stats ----------
    w_spec = (_pinned_spec((TK, Cp), lambda i, k: (k, 0)) if GK == 1
              else pl.BlockSpec((TK, Cp), lambda i, k: (k, 0)))
    y, stats = pl.pallas_call(
        _matmul_stats_kernel,
        out_shape=(
            jax.ShapeDtypeStruct((Mp, Cp), jnp.bfloat16),
            jax.ShapeDtypeStruct((GM * 8, Cp), jnp.float32),
        ),
        grid_spec=pltpu.PrefetchScalarGridSpec(
            num_scalar_prefetch=0,
            grid=(GM, GK),
            in_specs=[
                pl.BlockSpec((TM, TK), lambda i, k: (i, k)),     # cols stream
                w_spec,                                          # weight K-slice
            ],
            out_specs=[
                pl.BlockSpec((TM, Cp), lambda i, k: (i, 0)),     # conv output (bf16)
                pl.BlockSpec((8, Cp), lambda i, k: (i, 0)),      # per-tile stats
            ],
            scratch_shapes=[pltpu.VMEM((TM, Cp), jnp.float32)],  # f32 accumulator
        ),
        compiler_params=pltpu.CompilerParams(
            dimension_semantics=("parallel", "arbitrary"),
            vmem_limit_bytes=vmem_limit,
        ),
        cost_estimate=pl.CostEstimate(
            flops=int(2 * Mp * Kp * Cp),
            transcendentals=0,
            bytes_accessed=int(2 * Mp * Kp + 2 * Kp * Cp * (GM if GK > 1 else 1)
                               + 2 * Mp * Cp + 4 * GM * 8 * Cp),
        ),
    )(cols, w_mat)

    # ---------------- finalize BN statistics (tiny, XLA) ----------------
    stats = stats.reshape(GM, 8, Cp)
    ssum = jnp.sum(stats[:, 0, :], axis=0)
    ssq = jnp.sum(stats[:, 1, :], axis=0)
    inv_m = 1.0 / float(M)                      # real rows only (padded rows are zero)
    mean = ssum * inv_m
    var = jnp.maximum(ssq * inv_m - mean * mean, 0.0)   # biased variance (BN training)
    gamma_p = jnp.pad(gamma.astype(jnp.float32), (0, Cp - Cout))
    beta_p = jnp.pad(beta.astype(jnp.float32), (0, Cp - Cout))
    scale = gamma_p * jax.lax.rsqrt(var + eps)
    shift = beta_p - mean * scale

    # ---------------- pass 2: normalize + ReLU with its own (larger) row tile --------
    k_mul = 1
    for cand in range(1, GM + 1):
        if GM % cand:
            continue
        if TM * cand > 2048:
            continue
        if GM >= 2 and GM // cand < 2:          # keep >=2 tiles for v7x megacore
            continue
        k_mul = cand
    TM2 = TM * k_mul
    GM2 = Mp // TM2

    out = pl.pallas_call(
        _bn_relu_kernel,
        out_shape=jax.ShapeDtypeStruct((Mp, Cp), out_dtype),
        grid_spec=pltpu.PrefetchScalarGridSpec(
            num_scalar_prefetch=0,
            grid=(GM2,),
            in_specs=[
                pl.BlockSpec((TM2, Cp), lambda i: (i, 0)),       # conv output stream
                _pinned_spec((1, Cp), lambda i: (0, 0)),         # pinned scale
                _pinned_spec((1, Cp), lambda i: (0, 0)),         # pinned shift
            ],
            out_specs=pl.BlockSpec((TM2, Cp), lambda i: (i, 0)),
        ),
        compiler_params=pltpu.CompilerParams(
            dimension_semantics=("parallel",),
            vmem_limit_bytes=vmem_limit,
        ),
        cost_estimate=pl.CostEstimate(
            flops=int(2 * Mp * Cp),
            transcendentals=0,
            bytes_accessed=int(2 * Mp * Cp
                               + jnp.dtype(out_dtype).itemsize * Mp * Cp + 8 * Cp),
        ),
    )(y, scale.reshape(1, Cp), shift.reshape(1, Cp))

    return out[:M, :Cout].reshape(N, H, W, Cout)


# -----------------------------------------------------------------------------
# JAX glue: bilinear upsample (scale 2, align_corners=True), pad
# -----------------------------------------------------------------------------
def _bilinear_up2_align_corners(x_nhwc):
    """Matches nn.Upsample(scale_factor=2, mode='bilinear', align_corners=True).

    Gather-based: align_corners=True has position-dependent interpolation weights,
    so the fixed {1, 0.5} reshape/average trick does not apply here.
    """
    N, H, W, C = x_nhwc.shape
    Ho, Wo = 2 * H, 2 * W

    def coords(n_in, n_out):
        if n_in == 1 or n_out == 1:
            z = jnp.zeros((n_out,), jnp.float32)
            zi = jnp.zeros((n_out,), jnp.int32)
            return z, zi, zi
        pos = jnp.arange(n_out, dtype=jnp.float32) * (n_in - 1) / (n_out - 1)
        lo = jnp.floor(pos).astype(jnp.int32)
        hi = jnp.minimum(lo + 1, n_in - 1)
        return pos - lo.astype(jnp.float32), lo, hi

    fy, y0, y1 = coords(H, Ho)
    fx, x0, x1 = coords(W, Wo)

    top = x_nhwc[:, y0, :, :]
    bot = x_nhwc[:, y1, :, :]
    rows = top * (1.0 - fy)[None, :, None, None] + bot * fy[None, :, None, None]
    left = rows[:, :, x0, :]
    right = rows[:, :, x1, :]
    return left * (1.0 - fx)[None, None, :, None] + right * fx[None, None, :, None]


# -----------------------------------------------------------------------------
# Up.forward
# -----------------------------------------------------------------------------
@jax.jit
def up_forward(x1_nchw, x2_nchw, params):
    # NCHW -> NHWC
    x1 = jnp.transpose(x1_nchw, (0, 2, 3, 1))
    x2 = jnp.transpose(x2_nchw, (0, 2, 3, 1))

    # self.up(x1)
    x1 = _bilinear_up2_align_corners(x1)

    # F.pad(x1, [diffX//2, diffX - diffX//2, diffY//2, diffY - diffY//2])
    diffY = x2.shape[1] - x1.shape[1]
    diffX = x2.shape[2] - x1.shape[2]
    x1 = jnp.pad(
        x1,
        ((0, 0),
         (diffY // 2, diffY - diffY // 2),
         (diffX // 2, diffX - diffX // 2),
         (0, 0)),
    )

    # torch.cat([x2, x1], dim=1) is folded into the im2col tap build (x2 channels
    # first, then x1) -- the concatenated activation is never materialized.
    # DoubleConv: (conv3x3 + BN + ReLU) x 2 -- Pallas hot path.  The intermediate
    # activation between the two convs is kept in bf16; the final output is f32.
    # Conv biases (params["b1"], params["b2"]) cancel exactly under BatchNorm's
    # batch-mean subtraction, so they are not used in compute.
    y = _conv3x3_bn_relu((x2, x1), params["w1"], params["g1"], params["beta1"],
                         out_dtype=jnp.bfloat16)
    y = _conv3x3_bn_relu((y,), params["w2"], params["g2"], params["beta2"],
                         out_dtype=jnp.float32)

    # NHWC -> NCHW to match PyTorch output convention
    return jnp.transpose(y, (0, 3, 1, 2))


def init_params(key, in_channels, out_channels):
    """Deterministic synthetic parameters (shapes from DoubleConv.__init__)."""
    ks = jax.random.split(key, 6)
    f32 = jnp.float32
    # Conv weights stored HWIO (3, 3, Cin, Cout); PyTorch uses OIHW -- same conv math.
    w1 = 0.1 * jax.random.normal(ks[0], (3, 3, in_channels, out_channels), f32)
    b1 = 0.05 * jax.random.normal(ks[1], (out_channels,), f32)
    w2 = 0.1 * jax.random.normal(ks[2], (3, 3, out_channels, out_channels), f32)
    b2 = 0.05 * jax.random.normal(ks[3], (out_channels,), f32)
    # BatchNorm affine params (gamma near 1, beta small)
    g1 = 1.0 + 0.1 * jax.random.normal(ks[4], (out_channels,), f32)
    beta1 = 0.05 * jax.random.normal(ks[5], (out_channels,), f32)
    g2 = jnp.ones((out_channels,), f32)
    beta2 = jnp.zeros((out_channels,), f32)
    return dict(w1=w1, b1=b1, g1=g1, beta1=beta1,
                w2=w2, b2=b2, g2=g2, beta2=beta2)


if __name__ == "__main__":
    key = jax.random.PRNGKey(0)
    k1, k2, kp = jax.random.split(key, 3)

    # x1 is the lower-resolution feature map (gets upsampled 2x),
    # x2 is the skip connection at the target resolution.
    N, C1, C2 = 2, 4, 4
    x1 = jax.random.normal(k1, (N, C1, 8, 8), jnp.float32)    # NCHW
    x2 = jax.random.normal(k2, (N, C2, 16, 16), jnp.float32)  # NCHW

    in_channels = C1 + C2   # channels after torch.cat([x2, x1], dim=1)
    out_channels = 4
    params = init_params(kp, in_channels, out_channels)

    out = up_forward(x1, x2, params)
    out = jax.block_until_ready(out)

    assert out.shape == (N, out_channels, 16, 16), out.shape
    assert bool(jnp.all(jnp.isfinite(out)))
    print("KERNEL_OK")
</pallas_src>

<mosaic_0001>
module attributes {stable_mosaic.version = 11 : i64} {
  func.func @_matmul_stats_kernel(%arg0: i32, %arg1: i32, %arg2: memref<256x128xbf16, #tpu.memory_space<vmem>>, %arg3: memref<128x128xbf16, #tpu.memory_space<vmem>>, %arg4: memref<256x128xbf16, #tpu.memory_space<vmem>>, %arg5: memref<8x128xf32, #tpu.memory_space<vmem>>, %arg6: memref<256x128xf32, #tpu.memory_space<vmem>>) attributes {dimension_semantics = [#tpu.dimension_semantics<parallel>, #tpu.dimension_semantics<arbitrary>], iteration_bounds = array<i64: 2, 1>, scalar_prefetch = 0 : i64, scratch_operands = 1 : i64, tpu.core_type = #tpu.core_type<tc>, window_params = [{transform_indices = @transform_0, window_bounds = array<i64: 256, 128>}, {pipeline_mode = #tpu.pipeline_mode<synchronous>, transform_indices = @transform_1, window_bounds = array<i64: 128, 128>}, {transform_indices = @transform_2, window_bounds = array<i64: 256, 128>}, {transform_indices = @transform_3, window_bounds = array<i64: 8, 128>}]} {
    %c0_i32 = arith.constant 0 : i32
    %0 = arith.cmpi eq, %arg1, %c0_i32 : i32
    %1 = arith.extui %0 : i1 to i32
    %c0_i32_0 = arith.constant 0 : i32
    %2 = arith.cmpi ne, %1, %c0_i32_0 : i32
    scf.if %2 {
      %cst_10 = arith.constant 0.000000e+00 : f32
      %12 = vector.broadcast %cst_10 : f32 to vector<256x128xf32>
      %c0_11 = arith.constant 0 : index
      %c0_12 = arith.constant 0 : index
      %13 = vector.load %arg6[%c0_11, %c0_12] : memref<256x128xf32, #tpu.memory_space<vmem>>, vector<256x128xf32>
      tpu.vector_store %arg6[%c0_11, %c0_12], %12 {strides = array<i32>} : memref<256x128xf32, #tpu.memory_space<vmem>>, vector<256x128xf32>,
    } else {
    }
    %c0 = arith.constant 0 : index
    %c0_1 = arith.constant 0 : index
    %3 = vector.load %arg6[%c0, %c0_1] : memref<256x128xf32, #tpu.memory_space<vmem>>, vector<256x128xf32>
    %c0_2 = arith.constant 0 : index
    %c0_3 = arith.constant 0 : index
    %4 = vector.load %arg2[%c0_2, %c0_3] : memref<256x128xbf16, #tpu.memory_space<vmem>>, vector<256x128xbf16>
    %c0_4 = arith.constant 0 : index
    %c0_5 = arith.constant 0 : index
    %5 = vector.load %arg3[%c0_4, %c0_5] : memref<128x128xbf16, #tpu.memory_space<vmem>>, vector<128x128xbf16>
    %cst = arith.constant dense<0.000000e+00> : vector<256x128xf32>
    %6 = tpu.matmul %4, %5, %cst {dimension_numbers = #tpu.dot_dimension_numbers<[1], [0], [0], [1], [0, 0, 1, 1], [], []>} : vector<256x128xbf16>, vector<128x128xbf16>, vector<256x128xf32> -> vector<256x128xf32>
    %7 = arith.addf %3, %6 : vector<256x128xf32>
    %c0_6 = arith.constant 0 : index
    %c0_7 = arith.constant 0 : index
    %8 = vector.load %arg6[%c0_6, %c0_7] : memref<256x128xf32, #tpu.memory_space<vmem>>, vector<256x128xf32>
    tpu.vector_store %arg6[%c0_6, %c0_7], %7 {strides = array<i32>} : memref<256x128xf32, #tpu.memory_space<vmem>>, vector<256x128xf32>,
    %c0_i32_8 = arith.constant 0 : i32
    %9 = arith.cmpi eq, %arg1, %c0_i32_8 : i32
    %10 = arith.extui %9 : i1 to i32
    %c0_i32_9 = arith.constant 0 : i32
    %11 = arith.cmpi ne, %10, %c0_i32_9 : i32
    scf.if %11 {
      %c0_10 = arith.constant 0 : index
      %c0_11 = arith.constant 0 : index
      %12 = vector.load %arg6[%c0_10, %c0_11] : memref<256x128xf32, #tpu.memory_space<vmem>>, vector<256x128xf32>
      %13 = arith.truncf %12 : vector<256x128xf32> to vector<256x128xbf16>
      %c0_12 = arith.constant 0 : index
      %c0_13 = arith.constant 0 : index
      %14 = vector.load %arg4[%c0_12, %c0_13] : memref<256x128xbf16, #tpu.memory_space<vmem>>, vector<256x128xbf16>
      tpu.vector_store %arg4[%c0_12, %c0_13], %13 {strides = array<i32>} : memref<256x128xbf16, #tpu.memory_space<vmem>>, vector<256x128xbf16>,
      %cst_14 = arith.constant dense<0.000000e+00> : vector<128xf32>
      %15 = vector.multi_reduction <add>, %12, %cst_14 [0] : vector<256x128xf32> to vector<128xf32>
      %16 = vector.shape_cast %15 : vector<128xf32> to vector<1x128xf32>
      %c0_15 = arith.constant 0 : index
      %c0_16 = arith.constant 0 : index
      %17 = vector.load %arg5[%c0_15, %c0_16] : memref<8x128xf32, #tpu.memory_space<vmem>>, vector<1x128xf32>
      tpu.vector_store %arg5[%c0_15, %c0_16], %16 {strides = array<i32>} : memref<8x128xf32, #tpu.memory_space<vmem>>, vector<1x128xf32>,
      %18 = arith.mulf %12, %12 : vector<256x128xf32>
      %cst_17 = arith.constant dense<0.000000e+00> : vector<128xf32>
      %19 = vector.multi_reduction <add>, %18, %cst_17 [0] : vector<256x128xf32> to vector<128xf32>
      %20 = vector.shape_cast %19 : vector<128xf32> to vector<1x128xf32>
      %c1 = arith.constant 1 : index
      %c0_18 = arith.constant 0 : index
      %21 = vector.load %arg5[%c1, %c0_18] : memref<8x128xf32, #tpu.memory_space<vmem>>, vector<1x128xf32>
      tpu.vector_store %arg5[%c1, %c0_18], %20 {strides = array<i32>} : memref<8x128xf32, #tpu.memory_space<vmem>>, vector<1x128xf32>,
    } else {
    }
    return
  }
  func.func @transform_0(%arg0: i32, %arg1: i32) -> (i32, i32) {
    %c0_i32 = arith.constant 0 : i32
    return %arg0, %arg1 : i32, i32
  }
  func.func @transform_1(%arg0: i32, %arg1: i32) -> (i32, i32) {
    %c0_i32 = arith.constant 0 : i32
    %c0_i32_0 = arith.constant 0 : i32
    return %arg1, %c0_i32 : i32, i32
  }
  func.func @transform_2(%arg0: i32, %arg1: i32) -> (i32, i32) {
    %c0_i32 = arith.constant 0 : i32
    %c0_i32_0 = arith.constant 0 : i32
    return %arg0, %c0_i32 : i32, i32
  }
  func.func @transform_3(%arg0: i32, %arg1: i32) -> (i32, i32) {
    %c0_i32 = arith.constant 0 : i32
    %c0_i32_0 = arith.constant 0 : i32
    return %arg0, %c0_i32 : i32, i32
  }
}

module attributes {stable_mosaic.version = 11 : i64} {
  func.func @_bn_relu_kernel(%arg0: i32, %arg1: memref<256x128xbf16, #tpu.memory_space<vmem>>, %arg2: memref<1x128xf32, #tpu.memory_space<vmem>>, %arg3: memref<1x128xf32, #tpu.memory_space<vmem>>, %arg4: memref<256x128xbf16, #tpu.memory_space<vmem>>) attributes {dimension_semantics = [#tpu.dimension_semantics<parallel>], iteration_bounds = array<i64: 2>, scalar_prefetch = 0 : i64, scratch_operands = 0 : i64, tpu.core_type = #tpu.core_type<tc>, window_params = [{transform_indices = @transform_0, window_bounds = array<i64: 256, 128>}, {pipeline_mode = #tpu.pipeline_mode<synchronous>, transform_indices = @transform_1, window_bounds = array<i64: 1, 128>}, {pipeline_mode = #tpu.pipeline_mode<synchronous>, transform_indices = @transform_2, window_bounds = array<i64: 1, 128>}, {transform_indices = @transform_3, window_bounds = array<i64: 256, 128>}]} {
    %c0 = arith.constant 0 : index
    %c0_0 = arith.constant 0 : index
    %0 = vector.load %arg1[%c0, %c0_0] : memref<256x128xbf16, #tpu.memory_space<vmem>>, vector<256x128xbf16>
    %1 = arith.extf %0 : vector<256x128xbf16> to vector<256x128xf32>
    %c0_1 = arith.constant 0 : index
    %c0_2 = arith.constant 0 : index
    %2 = vector.load %arg2[%c0_1, %c0_2] : memref<1x128xf32, #tpu.memory_space<vmem>>, vector<1x128xf32>
    %3 = vector.broadcast %2 : vector<1x128xf32> to vector<256x128xf32>
    %4 = arith.mulf %1, %3 : vector<256x128xf32>
    %c0_3 = arith.constant 0 : index
    %c0_4 = arith.constant 0 : index
    %5 = vector.load %arg3[%c0_3, %c0_4] : memref<1x128xf32, #tpu.memory_space<vmem>>, vector<1x128xf32>
    %6 = vector.broadcast %5 : vector<1x128xf32> to vector<256x128xf32>
    %7 = arith.addf %4, %6 : vector<256x128xf32>
    %cst = arith.constant 0.000000e+00 : f32
    %8 = vector.broadcast %cst : f32 to vector<256x128xf32>
    %9 = arith.maximumf %7, %8 : vector<256x128xf32>
    %10 = arith.truncf %9 : vector<256x128xf32> to vector<256x128xbf16>
    %c0_5 = arith.constant 0 : index
    %c0_6 = arith.constant 0 : index
    %11 = vector.load %arg4[%c0_5, %c0_6] : memref<256x128xbf16, #tpu.memory_space<vmem>>, vector<256x128xbf16>
    tpu.vector_store %arg4[%c0_5, %c0_6], %10 {strides = array<i32>} : memref<256x128xbf16, #tpu.memory_space<vmem>>, vector<256x128xbf16>,
    return
  }
  func.func @transform_0(%arg0: i32) -> (i32, i32) {
    %c0_i32 = arith.constant 0 : i32
    %c0_i32_0 = arith.constant 0 : i32
    return %arg0, %c0_i32 : i32, i32
  }
  func.func @transform_1(%arg0: i32) -> (i32, i32) {
    %c0_i32 = arith.constant 0 : i32
    %c0_i32_0 = arith.constant 0 : i32
    %c0_i32_1 = arith.constant 0 : i32
    return %c0_i32, %c0_i32_0 : i32, i32
  }
  func.func @transform_2(%arg0: i32) -> (i32, i32) {
    %c0_i32 = arith.constant 0 : i32
    %c0_i32_0 = arith.constant 0 : i32
    %c0_i32_1 = arith.constant 0 : i32
    return %c0_i32, %c0_i32_0 : i32, i32
  }
  func.func @transform_3(%arg0: i32) -> (i32, i32) {
    %c0_i32 = arith.constant 0 : i32
    %c0_i32_0 = arith.constant 0 : i32
    return %arg0, %c0_i32 : i32, i32
  }
}

module attributes {stable_mosaic.version = 11 : i64} {
  func.func @_bn_relu_kernel(%arg0: i32, %arg1: memref<256x128xbf16, #tpu.memory_space<vmem>>, %arg2: memref<1x128xf32, #tpu.memory_space<vmem>>, %arg3: memref<1x128xf32, #tpu.memory_space<vmem>>, %arg4: memref<256x128xf32, #tpu.memory_space<vmem>>) attributes {dimension_semantics = [#tpu.dimension_semantics<parallel>], iteration_bounds = array<i64: 2>, scalar_prefetch = 0 : i64, scratch_operands = 0 : i64, tpu.core_type = #tpu.core_type<tc>, window_params = [{transform_indices = @transform_0, window_bounds = array<i64: 256, 128>}, {pipeline_mode = #tpu.pipeline_mode<synchronous>, transform_indices = @transform_1, window_bounds = array<i64: 1, 128>}, {pipeline_mode = #tpu.pipeline_mode<synchronous>, transform_indices = @transform_2, window_bounds = array<i64: 1, 128>}, {transform_indices = @transform_3, window_bounds = array<i64: 256, 128>}]} {
    %c0 = arith.constant 0 : index
    %c0_0 = arith.constant 0 : index
    %0 = vector.load %arg1[%c0, %c0_0] : memref<256x128xbf16, #tpu.memory_space<vmem>>, vector<256x128xbf16>
    %1 = arith.extf %0 : vector<256x128xbf16> to vector<256x128xf32>
    %c0_1 = arith.constant 0 : index
    %c0_2 = arith.constant 0 : index
    %2 = vector.load %arg2[%c0_1, %c0_2] : memref<1x128xf32, #tpu.memory_space<vmem>>, vector<1x128xf32>
    %3 = vector.broadcast %2 : vector<1x128xf32> to vector<256x128xf32>
    %4 = arith.mulf %1, %3 : vector<256x128xf32>
    %c0_3 = arith.constant 0 : index
    %c0_4 = arith.constant 0 : index
    %5 = vector.load %arg3[%c0_3, %c0_4] : memref<1x128xf32, #tpu.memory_space<vmem>>, vector<1x128xf32>
    %6 = vector.broadcast %5 : vector<1x128xf32> to vector<256x128xf32>
    %7 = arith.addf %4, %6 : vector<256x128xf32>
    %cst = arith.constant 0.000000e+00 : f32
    %8 = vector.broadcast %cst : f32 to vector<256x128xf32>
    %9 = arith.maximumf %7, %8 : vector<256x128xf32>
    %c0_5 = arith.constant 0 : index
    %c0_6 = arith.constant 0 : index
    %10 = vector.load %arg4[%c0_5, %c0_6] : memref<256x128xf32, #tpu.memory_space<vmem>>, vector<256x128xf32>
    tpu.vector_store %arg4[%c0_5, %c0_6], %9 {strides = array<i32>} : memref<256x128xf32, #tpu.memory_space<vmem>>, vector<256x128xf32>,
    return
  }
  func.func @transform_0(%arg0: i32) -> (i32, i32) {
    %c0_i32 = arith.constant 0 : i32
    %c0_i32_0 = arith.constant 0 : i32
    return %arg0, %c0_i32 : i32, i32
  }
  func.func @transform_1(%arg0: i32) -> (i32, i32) {
    %c0_i32 = arith.constant 0 : i32
    %c0_i32_0 = arith.constant 0 : i32
    %c0_i32_1 = arith.constant 0 : i32
    return %c0_i32, %c0_i32_0 : i32, i32
  }
  func.func @transform_2(%arg0: i32) -> (i32, i32) {
    %c0_i32 = arith.constant 0 : i32
    %c0_i32_0 = arith.constant 0 : i32
    %c0_i32_1 = arith.constant 0 : i32
    return %c0_i32, %c0_i32_0 : i32, i32
  }
  func.func @transform_3(%arg0: i32) -> (i32, i32) {
    %c0_i32 = arith.constant 0 : i32
    %c0_i32_0 = arith.constant 0 : i32
    return %arg0, %c0_i32 : i32, i32
  }
}

</mosaic_0001>

<llo_original>
// kernel: up_forward.5
$region0: #{up_forward.5}
  #allocation0 [shape = 'u32[]', space=smem, size = 0x4, offset = 0x4, fixed_abs, tag = 'smem constant byte address 0x4 - core index']
  #allocation1 [shape = 'u32[144,128]{1,0:T(1,128)}', space=vmem, size = 0x12000, scoped, tag = 'internal scratch']
  %s0 = inlined_call_operand.vmem [shape: bf16[512,128], index: 0, kind: input, shape index: {}]
  %s1 = inlined_call_operand.vmem [shape: f32[1,128], index: 1, kind: input, shape index: {}]
  %s2 = inlined_call_operand.vmem [shape: f32[1,128], index: 2, kind: input, shape index: {}]
  %s3 = inlined_call_operand.vmem [shape: bf16[512,128], index: 3, kind: output, shape index: {}]
  %s4 = sld [smem:[#allocation0]]
  $region45: #{up_forward.5} parent=0
    _
  %s6 = ssub.s32 1, %s4
  %s7 = scalar_select 0, %s6, %s4
  loop: start=0, step=1, limit=4
  $region2: #{up_forward.5} parent=0 // loop_pre_header
    _
  $region3: #{up_forward.5} parent=0 // loop_header
    %s9 = sphi 0, %s13
    %p10 = scmp.ge.s32.totalorder %s9, 4
    %s19 = sphi 0, %s21
    %s22 = sphi 0, %s19
    %s23 = sphi 0, %s22
    %s39 = sphi 0, %s23
    %s43 = sphi 0, %s43
    %s45 = sphi 0, %s43
    %s46 = sphi 0, %s45
    %s60 = sphi 0, %s46
    %s64 = sphi 0, %s64
    %s66 = sphi 0, %s64
    %s67 = sphi 0, %s66
    %s81 = sphi 0, %s67
    %s87 = sphi 0, %s89
    %s90 = sphi 0, %s87
    %s91 = sphi 0, %s90
    %s107 = sphi 0, %s91
  $region4: #{up_forward.5} parent=0 // loop_header_branch
    %12 = sbr.rel (%p10) target = $region8
  $region5: #{up_forward.5} parent=0 // loop_body
    %s14 = ssub.s32 %s9, 1
    %s15 = ssub.s32 %s9, 2
    %s16 = sadd.s32 %s9, 1
    %s17 = ssub.s32 %s9, %s16
    %p18 = scmp.eq.s32.totalorder %s17, 0
    %s20 = sadd.s32 %s19, 1
    %s21 = scalar_select %p18, %s19, %s20
    %p24 = pneg %p18
    %p25 = scmp.eq.s32.totalorder %s9, 1
    %p26 = por %p24, %p25
    %p27 = scmp.ne.s32.totalorder %s19, %s22
    %p28 = scmp.eq.s32.totalorder %s9, 0
    %p29 = por %p27, %p28
    %p30 = scmp.ne.s32.totalorder %s19, %s22
    %p31 = scmp.eq.s32.totalorder %s14, 1
    %p32 = por %p30, %p31
    %p33 = scmp.ne.s32.totalorder %s22, %s23
    %p34 = scmp.eq.s32.totalorder %s14, 0
    %p35 = por %p33, %p34
    %p36 = scmp.ne.s32.totalorder %s22, %s23
    %p37 = scmp.eq.s32.totalorder %s15, 1
    %p38 = por %p36, %p37
    %p40 = scmp.ne.s32.totalorder %s23, %s39
    %p41 = scmp.eq.s32.totalorder %s15, 0
    %p42 = por %p40, %p41
    %s44 = sadd.s32 %s43, 1
    %p47 = scmp.eq.s32.totalorder %s9, 1
    %p48 = scmp.ne.s32.totalorder %s43, %s45
    %p49 = scmp.eq.s32.totalorder %s9, 0
    %p50 = por %p48, %p49
    %p51 = scmp.ne.s32.totalorder %s43, %s45
    %p52 = scmp.eq.s32.totalorder %s14, 1
    %p53 = por %p51, %p52
    %p54 = scmp.ne.s32.totalorder %s45, %s46
    %p55 = scmp.eq.s32.totalorder %s14, 0
    %p56 = por %p54, %p55
    %p57 = scmp.ne.s32.totalorder %s45, %s46
    %p58 = scmp.eq.s32.totalorder %s15, 1
    %p59 = por %p57, %p58
    %p61 = scmp.ne.s32.totalorder %s46, %s60
    %p62 = scmp.eq.s32.totalorder %s15, 0
    %p63 = por %p61, %p62
    %s65 = sadd.s32 %s64, 1
    %p68 = scmp.eq.s32.totalorder %s9, 1
    %p69 = scmp.ne.s32.totalorder %s64, %s66
    %p70 = scmp.eq.s32.totalorder %s9, 0
    %p71 = por %p69, %p70
    %p72 = scmp.ne.s32.totalorder %s64, %s66
    %p73 = scmp.eq.s32.totalorder %s14, 1
    %p74 = por %p72, %p73
    %p75 = scmp.ne.s32.totalorder %s66, %s67
    %p76 = scmp.eq.s32.totalorder %s14, 0
    %p77 = por %p75, %p76
    %p78 = scmp.ne.s32.totalorder %s66, %s67
    %p79 = scmp.eq.s32.totalorder %s15, 1
    %p80 = por %p78, %p79
    %p82 = scmp.ne.s32.totalorder %s67, %s81
    %p83 = scmp.eq.s32.totalorder %s15, 0
    %p84 = por %p82, %p83
    %s85 = ssub.s32 %s9, %s16
    %p86 = scmp.eq.s32.totalorder %s85, 0
    %s88 = sadd.s32 %s87, 1
    %s89 = scalar_select %p86, %s87, %s88
    %p92 = pneg %p86
    %p93 = scmp.eq.s32.totalorder %s9, 1
    %p94 = por %p92, %p93
    %p95 = scmp.ne.s32.totalorder %s87, %s90
    %p96 = scmp.eq.s32.totalorder %s9, 0
    %p97 = por %p95, %p96
    %p98 = scmp.ne.s32.totalorder %s87, %s90
    %p99 = scmp.eq.s32.totalorder %s14, 1
    %p100 = por %p98, %p99
    %p101 = scmp.ne.s32.totalorder %s90, %s91
    %p102 = scmp.eq.s32.totalorder %s14, 0
    %p103 = por %p101, %p102
    %p104 = scmp.ne.s32.totalorder %s90, %s91
    %p105 = scmp.eq.s32.totalorder %s15, 1
    %p106 = por %p104, %p105
    %p108 = scmp.ne.s32.totalorder %s91, %s107
    %p109 = scmp.eq.s32.totalorder %s15, 0
    %p110 = por %p108, %p109
    %p111 = scmp.le.s32.totalorder 1, %s9
    %p112 = scmp.lt.s32.totalorder %s9, 3
    %p113 = pnand %p111, %p112
    %p114 = pneg %p113
    // Predicated region
    $region9: #{up_forward.5} parent=5 // pred_check
      _
    $region10: #{up_forward.5} parent=5 // pred_check_branch
      %116 = sbr.rel (%p113) target = $region12
    $region11: #{up_forward.5} parent=5 // pred_region
      %s117 = ssub.s32 %s9, 1
      // Predicated region
      $region13: #{up_forward.5} parent=11 // pred_check
        %p118 = pneg %p56
      $region14: #{up_forward.5} parent=11 // pred_check_branch
        %120 = sbr.rel (%p118) target = $region16
      $region15: #{up_forward.5} parent=11 // pred_region
        _
      $region16: #{up_forward.5} parent=11 // pred_fallthru
        _
      // Predicated region
      $region17: #{up_forward.5} parent=11 // pred_check
        %p121 = pneg %p77
      $region18: #{up_forward.5} parent=11 // pred_check_branch
        %123 = sbr.rel (%p121) target = $region20
      $region19: #{up_forward.5} parent=11 // pred_region
        _
      $region20: #{up_forward.5} parent=11 // pred_fallthru
        _
    $region12: #{up_forward.5} parent=5 // pred_fallthru
      _
    %p124 = scmp.lt.s32.totalorder %s9, 2
    // Predicated region
    $region21: #{up_forward.5} parent=5 // pred_check
      %p125 = pneg %p124
    $region22: #{up_forward.5} parent=5 // pred_check_branch
      %127 = sbr.rel (%p125) target = $region24
    $region23: #{up_forward.5} parent=5 // pred_region
      // Predicated region
      $region25: #{up_forward.5} parent=23 // pred_check
        %p128 = pneg %p29
      $region26: #{up_forward.5} parent=23 // pred_check_branch
        %130 = sbr.rel (%p128) target = $region28
      $region27: #{up_forward.5} parent=23 // pred_region
        %s131 = smul.u32 32, %s9
        %p132 = scmp.lt.s32.totalorder %s131, 63
        %s133 = scalar_select %p132, %s131, 63
        %s134 = smul.addr %s133, 4
        %s135 = scalar_lea.vmem %s0, %s134
        %s136 = smul.u32 32, %s9
      $region28: #{up_forward.5} parent=23 // pred_fallthru
        _
    $region24: #{up_forward.5} parent=5 // pred_fallthru
      _
    %p137 = scmp.le.s32.totalorder 1, %s9
    %p138 = scmp.lt.s32.totalorder %s9, 3
    %p139 = pnand %p137, %p138
    %p140 = pneg %p139
    // Predicated region
    $region29: #{up_forward.5} parent=5 // pred_check
      _
    $region30: #{up_forward.5} parent=5 // pred_check_branch
      %142 = sbr.rel (%p139) target = $region32
    $region31: #{up_forward.5} parent=5 // pred_region
      %s143 = ssub.s32 %s9, 1
      %s144 = smul.u32 32, %s14
      %p145 = scmp.lt.s32.totalorder %s144, 63
      %s146 = scalar_select %p145, %s144, 63
      %s147 = smul.addr %s146, 4
      %s148 = scalar_lea.vmem %s0, %s147
      %p149 = pneg %p35
      %p150 = pneg %p32
      %p151 = pneg %p56
      %p152 = pneg %p53
      %p153 = pneg %p77
      %p154 = pneg %p74
      %p155 = pneg %p103
      %p156 = pneg %p100
      %s157 = smul.u32 32, %s14
      %p158 = scmp.lt.s32.totalorder %s157, 63
      %s159 = scalar_select %p158, %s157, 63
      %s160 = smul.addr %s159, 4
      %s161 = scalar_lea.vmem %s3, %s160
      %s162 = smul.u32 32, %s14
      %p163 = scmp.lt.s32.totalorder %s162, 63
      %s164 = scalar_select %p163, %s162, 63
      %s165 = smul.addr %s164, 4
      %s166 = scalar_lea.vmem %s0, %s165
      %s167 = smul.u32 32, %s14
      %s168 = smul.u32 32, %s14
      %p169 = scmp.lt.s32.totalorder %s168, 63
      %s170 = scalar_select %p169, %s168, 63
      %s171 = smul.addr %s170, 4
      %s172 = scalar_lea.vmem %s3, %s171
      %s173 = smul.u32 32, %s14
      %v174 = vld [vmem:[%s166] sm:$0xf]
      %v175 = vld [vmem:[%s166 + $0x4] sm:$0xf]
      %v176 = vld [vmem:[%s166 + $0x8] sm:$0xf]
      %v177 = vld [vmem:[%s166 + $0xc] sm:$0xf]
      %v178 = vld [vmem:[%s166 + $0x10] sm:$0xf]
      %v179 = vld [vmem:[%s166 + $0x14] sm:$0xf]
      %v180 = vld [vmem:[%s166 + $0x18] sm:$0xf]
      %v181 = vld [vmem:[%s166 + $0x1c] sm:$0xf]
      %v182 = vld [vmem:[%s166 + $0x20] sm:$0xf]
      %v183 = vld [vmem:[%s166 + $0x24] sm:$0xf]
      %v184 = vld [vmem:[%s166 + $0x28] sm:$0xf]
      %v185 = vld [vmem:[%s166 + $0x2c] sm:$0xf]
      %v186 = vld [vmem:[%s166 + $0x30] sm:$0xf]
      %v187 = vld [vmem:[%s166 + $0x34] sm:$0xf]
      %v188 = vld [vmem:[%s166 + $0x38] sm:$0xf]
      %v189 = vld [vmem:[%s166 + $0x3c] sm:$0xf]
      %v190 = vld [vmem:[%s166 + $0x40] sm:$0xf]
      %v191 = vld [vmem:[%s166 + $0x44] sm:$0xf]
      %v192 = vld [vmem:[%s166 + $0x48] sm:$0xf]
      %v193 = vld [vmem:[%s166 + $0x4c] sm:$0xf]
      %v194 = vld [vmem:[%s166 + $0x50] sm:$0xf]
      %v195 = vld [vmem:[%s166 + $0x54] sm:$0xf]
      %v196 = vld [vmem:[%s166 + $0x58] sm:$0xf]
      %v197 = vld [vmem:[%s166 + $0x5c] sm:$0xf]
      %v198 = vld [vmem:[%s166 + $0x60] sm:$0xf]
      %v199 = vld [vmem:[%s166 + $0x64] sm:$0xf]
      %v200 = vld [vmem:[%s166 + $0x68] sm:$0xf]
      %v201 = vld [vmem:[%s166 + $0x6c] sm:$0xf]
      %v202 = vld [vmem:[%s166 + $0x70] sm:$0xf]
      %v203 = vld [vmem:[%s166 + $0x74] sm:$0xf]
      %v204 = vld [vmem:[%s166 + $0x78] sm:$0xf]
      %v205 = vld [vmem:[%s166 + $0x7c] sm:$0xf]
      %v206 = vunpack.c.l.bf16 %v174
      %v207 = vunpack.c.l.bf16 %v175
      %v208 = vunpack.c.l.bf16 %v176
      %v209 = vunpack.c.l.bf16 %v177
      %v210 = vunpack.c.l.bf16 %v178
      %v211 = vunpack.c.l.bf16 %v179
      %v212 = vunpack.c.l.bf16 %v180
      %v213 = vunpack.c.l.bf16 %v181
      %v214 = vunpack.c.l.bf16 %v182
      %v215 = vunpack.c.l.bf16 %v183
      %v216 = vunpack.c.l.bf16 %v184
      %v217 = vunpack.c.l.bf16 %v185
      %v218 = vunpack.c.l.bf16 %v186
      %v219 = vunpack.c.l.bf16 %v187
      %v220 = vunpack.c.l.bf16 %v188
      %v221 = vunpack.c.l.bf16 %v189
      %v222 = vunpack.c.l.bf16 %v190
      %v223 = vunpack.c.l.bf16 %v191
      %v224 = vunpack.c.l.bf16 %v192
      %v225 = vunpack.c.l.bf16 %v193
      %v226 = vunpack.c.l.bf16 %v194
      %v227 = vunpack.c.l.bf16 %v195
      %v228 = vunpack.c.l.bf16 %v196
      %v229 = vunpack.c.l.bf16 %v197
      %v230 = vunpack.c.l.bf16 %v198
      %v231 = vunpack.c.l.bf16 %v199
      %v232 = vunpack.c.l.bf16 %v200
      %v233 = vunpack.c.l.bf16 %v201
      %v234 = vunpack.c.l.bf16 %v202
      %v235 = vunpack.c.l.bf16 %v203
      %v236 = vunpack.c.l.bf16 %v204
      %v237 = vunpack.c.l.bf16 %v205
      %v238 = vld [vmem:[%s1] sm:$0x1]
      %v240 = vlaneseq
      %v241 = vshrl.u32 %v240, 7
      %v242 = vsub.s32 0, %v241
      %v243 = vrot.slane %v238, %v242
      %v245 = vmul.f32 %v206, %v243
      %v246 = vmul.f32 %v207, %v243
      %v247 = vmul.f32 %v208, %v243
      %v248 = vmul.f32 %v209, %v243
      %v249 = vmul.f32 %v210, %v243
      %v250 = vmul.f32 %v211, %v243
      %v251 = vmul.f32 %v212, %v243
      %v252 = vmul.f32 %v213, %v243
      %v253 = vmul.f32 %v214, %v243
      %v254 = vmul.f32 %v215, %v243
      %v255 = vmul.f32 %v216, %v243
      %v256 = vmul.f32 %v217, %v243
      %v257 = vmul.f32 %v218, %v243
      %v258 = vmul.f32 %v219, %v243
      %v259 = vmul.f32 %v220, %v243
      %v260 = vmul.f32 %v221, %v243
      %v261 = vmul.f32 %v222, %v243
      %v262 = vmul.f32 %v223, %v243
      %v263 = vmul.f32 %v224, %v243
      %v264 = vmul.f32 %v225, %v243
      %v265 = vmul.f32 %v226, %v243
      %v266 = vmul.f32 %v227, %v243
      %v267 = vmul.f32 %v228, %v243
      %v268 = vmul.f32 %v229, %v243
      %v269 = vmul.f32 %v230, %v243
      %v270 = vmul.f32 %v231, %v243
      %v271 = vmul.f32 %v232, %v243
      %v272 = vmul.f32 %v233, %v243
      %v273 = vmul.f32 %v234, %v243
      %v274 = vmul.f32 %v235, %v243
      %v275 = vmul.f32 %v236, %v243
      %v276 = vmul.f32 %v237, %v243
      %v277 = vld [vmem:[%s2] sm:$0x1]
      %v279 = vlaneseq
      %v280 = vshrl.u32 %v279, 7
      %v281 = vsub.s32 0, %v280
      %v282 = vrot.slane %v277, %v281
      %v284 = vadd.f32 %v245, %v282
      %v285 = vadd.f32 %v246, %v282
      %v286 = vadd.f32 %v247, %v282
      %v287 = vadd.f32 %v248, %v282
      %v288 = vadd.f32 %v249, %v282
      %v289 = vadd.f32 %v250, %v282
      %v290 = vadd.f32 %v251, %v282
      %v291 = vadd.f32 %v252, %v282
      %v292 = vadd.f32 %v253, %v282
      %v293 = vadd.f32 %v254, %v282
      %v294 = vadd.f32 %v255, %v282
      %v295 = vadd.f32 %v256, %v282
      %v296 = vadd.f32 %v257, %v282
      %v297 = vadd.f32 %v258, %v282
      %v298 = vadd.f32 %v259, %v282
      %v299 = vadd.f32 %v260, %v282
      %v300 = vadd.f32 %v261, %v282
      %v301 = vadd.f32 %v262, %v282
      %v302 = vadd.f32 %v263, %v282
      %v303 = vadd.f32 %v264, %v282
      %v304 = vadd.f32 %v265, %v282
      %v305 = vadd.f32 %v266, %v282
      %v306 = vadd.f32 %v267, %v282
      %v307 = vadd.f32 %v268, %v282
      %v308 = vadd.f32 %v269, %v282
      %v309 = vadd.f32 %v270, %v282
      %v310 = vadd.f32 %v271, %v282
      %v311 = vadd.f32 %v272, %v282
      %v312 = vadd.f32 %v273, %v282
      %v313 = vadd.f32 %v274, %v282
      %v314 = vadd.f32 %v275, %v282
      %v315 = vadd.f32 %v276, %v282
      %v316 = vmax.f32 %v284, 0.0
      %v317 = vmax.f32 %v285, 0.0
      %v318 = vmax.f32 %v286, 0.0
      %v319 = vmax.f32 %v287, 0.0
      %v320 = vmax.f32 %v288, 0.0
      %v321 = vmax.f32 %v289, 0.0
      %v322 = vmax.f32 %v290, 0.0
      %v323 = vmax.f32 %v291, 0.0
      %v324 = vmax.f32 %v292, 0.0
      %v325 = vmax.f32 %v293, 0.0
      %v326 = vmax.f32 %v294, 0.0
      %v327 = vmax.f32 %v295, 0.0
      %v328 = vmax.f32 %v296, 0.0
      %v329 = vmax.f32 %v297, 0.0
      %v330 = vmax.f32 %v298, 0.0
      %v331 = vmax.f32 %v299, 0.0
      %v332 = vmax.f32 %v300, 0.0
      %v333 = vmax.f32 %v301, 0.0
      %v334 = vmax.f32 %v302, 0.0
      %v335 = vmax.f32 %v303, 0.0
      %v336 = vmax.f32 %v304, 0.0
      %v337 = vmax.f32 %v305, 0.0
      %v338 = vmax.f32 %v306, 0.0
      %v339 = vmax.f32 %v307, 0.0
      %v340 = vmax.f32 %v308, 0.0
      %v341 = vmax.f32 %v309, 0.0
      %v342 = vmax.f32 %v310, 0.0
      %v343 = vmax.f32 %v311, 0.0
      %v344 = vmax.f32 %v312, 0.0
      %v345 = vmax.f32 %v313, 0.0
      %v346 = vmax.f32 %v314, 0.0
      %v347 = vmax.f32 %v315, 0.0
      %v348 = vpack.c.bf16 %v317, %v316
      %v349 = vpack.c.bf16 %v319, %v318
      %v350 = vpack.c.bf16 %v321, %v320
      %v351 = vpack.c.bf16 %v323, %v322
      %v352 = vpack.c.bf16 %v325, %v324
      %v353 = vpack.c.bf16 %v327, %v326
      %v354 = vpack.c.bf16 %v329, %v328
      %v355 = vpack.c.bf16 %v331, %v330
      %v356 = vpack.c.bf16 %v333, %v332
      %v357 = vpack.c.bf16 %v335, %v334
      %v358 = vpack.c.bf16 %v337, %v336
      %v359 = vpack.c.bf16 %v339, %v338
      %v360 = vpack.c.bf16 %v341, %v340
      %v361 = vpack.c.bf16 %v343, %v342
      %v362 = vpack.c.bf16 %v345, %v344
      %v363 = vpack.c.bf16 %v347, %v346
      %v380 = vunpack.c.l.b16 %v348
      %v381 = vunpack.c.h.b16 %v348
      %v382 = vunpack.c.l.b16 %v349
      %v383 = vunpack.c.h.b16 %v349
      %v384 = vunpack.c.l.b16 %v350
      %v385 = vunpack.c.h.b16 %v350
      %v386 = vunpack.c.l.b16 %v351
      %v387 = vunpack.c.h.b16 %v351
      %v388 = vunpack.c.l.b16 %v352
      %v389 = vunpack.c.h.b16 %v352
      %v390 = vunpack.c.l.b16 %v353
      %v391 = vunpack.c.h.b16 %v353
      %v392 = vunpack.c.l.b16 %v354
      %v393 = vunpack.c.h.b16 %v354
      %v394 = vunpack.c.l.b16 %v355
      %v395 = vunpack.c.h.b16 %v355
      %v396 = vunpack.c.l.b16 %v356
      %v397 = vunpack.c.h.b16 %v356
      %v398 = vunpack.c.l.b16 %v357
      %v399 = vunpack.c.h.b16 %v357
      %v400 = vunpack.c.l.b16 %v358
      %v401 = vunpack.c.h.b16 %v358
      %v402 = vunpack.c.l.b16 %v359
      %v403 = vunpack.c.h.b16 %v359
      %v404 = vunpack.c.l.b16 %v360
      %v405 = vunpack.c.h.b16 %v360
      %v406 = vunpack.c.l.b16 %v361
      %v407 = vunpack.c.h.b16 %v361
      %v408 = vunpack.c.l.b16 %v362
      %v409 = vunpack.c.h.b16 %v362
      %v410 = vunpack.c.l.b16 %v363
      %v411 = vunpack.c.h.b16 %v363
      %v412 = vpack.c.b16 %v380, %v380
      %v413 = vpack.c.b16 %v381, %v381
      %v414 = vpack.c.b16 %v382, %v382
      %v415 = vpack.c.b16 %v383, %v383
      %v416 = vpack.c.b16 %v384, %v384
      %v417 = vpack.c.b16 %v385, %v385
      %v418 = vpack.c.b16 %v386, %v386
      %v419 = vpack.c.b16 %v387, %v387
      %v420 = vpack.c.b16 %v388, %v388
      %v421 = vpack.c.b16 %v389, %v389
      %v422 = vpack.c.b16 %v390, %v390
      %v423 = vpack.c.b16 %v391, %v391
      %v424 = vpack.c.b16 %v392, %v392
      %v425 = vpack.c.b16 %v393, %v393
      %v426 = vpack.c.b16 %v394, %v394
      %v427 = vpack.c.b16 %v395, %v395
      %v428 = vpack.c.b16 %v396, %v396
      %v429 = vpack.c.b16 %v397, %v397
      %v430 = vpack.c.b16 %v398, %v398
      %v431 = vpack.c.b16 %v399, %v399
      %v432 = vpack.c.b16 %v400, %v400
      %v433 = vpack.c.b16 %v401, %v401
      %v434 = vpack.c.b16 %v402, %v402
      %v435 = vpack.c.b16 %v403, %v403
      %v436 = vpack.c.b16 %v404, %v404
      %v437 = vpack.c.b16 %v405, %v405
      %v438 = vpack.c.b16 %v406, %v406
      %v439 = vpack.c.b16 %v407, %v407
      %v440 = vpack.c.b16 %v408, %v408
      %v441 = vpack.c.b16 %v409, %v409
      %v442 = vpack.c.b16 %v410, %v410
      %v443 = vpack.c.b16 %v411, %v411
      %476 = vst [vmem:[%s172] sm:$0xf] %v412
      %477 = vst [vmem:[%s172 + $0x4] sm:$0xf] %v413
      %478 = vst [vmem:[%s172 + $0x8] sm:$0xf] %v414
      %479 = vst [vmem:[%s172 + $0xc] sm:$0xf] %v415
      %480 = vst [vmem:[%s172 + $0x10] sm:$0xf] %v416
      %481 = vst [vmem:[%s172 + $0x14] sm:$0xf] %v417
      %482 = vst [vmem:[%s172 + $0x18] sm:$0xf] %v418
      %483 = vst [vmem:[%s172 + $0x1c] sm:$0xf] %v419
      %484 = vst [vmem:[%s172 + $0x20] sm:$0xf] %v420
      %485 = vst [vmem:[%s172 + $0x24] sm:$0xf] %v421
      %486 = vst [vmem:[%s172 + $0x28] sm:$0xf] %v422
      %487 = vst [vmem:[%s172 + $0x2c] sm:$0xf] %v423
      %488 = vst [vmem:[%s172 + $0x30] sm:$0xf] %v424
      %489 = vst [vmem:[%s172 + $0x34] sm:$0xf] %v425
      %490 = vst [vmem:[%s172 + $0x38] sm:$0xf] %v426
      %491 = vst [vmem:[%s172 + $0x3c] sm:$0xf] %v427
      %492 = vst [vmem:[%s172 + $0x40] sm:$0xf] %v428
      %493 = vst [vmem:[%s172 + $0x44] sm:$0xf] %v429
      %494 = vst [vmem:[%s172 + $0x48] sm:$0xf] %v430
      %495 = vst [vmem:[%s172 + $0x4c] sm:$0xf] %v431
      %496 = vst [vmem:[%s172 + $0x50] sm:$0xf] %v432
      %497 = vst [vmem:[%s172 + $0x54] sm:$0xf] %v433
      %498 = vst [vmem:[%s172 + $0x58] sm:$0xf] %v434
      %499 = vst [vmem:[%s172 + $0x5c] sm:$0xf] %v435
      %500 = vst [vmem:[%s172 + $0x60] sm:$0xf] %v436
      %501 = vst [vmem:[%s172 + $0x64] sm:$0xf] %v437
      %502 = vst [vmem:[%s172 + $0x68] sm:$0xf] %v438
      %503 = vst [vmem:[%s172 + $0x6c] sm:$0xf] %v439
      %504 = vst [vmem:[%s172 + $0x70] sm:$0xf] %v440
      %505 = vst [vmem:[%s172 + $0x74] sm:$0xf] %v441
      %506 = vst [vmem:[%s172 + $0x78] sm:$0xf] %v442
      %507 = vst [vmem:[%s172 + $0x7c] sm:$0xf] %v443
      %s508 = smul.u32 32, %s14
      %p509 = scmp.lt.s32.totalorder %s508, 63
      %s510 = scalar_select %p509, %s508, 63
      %s511 = smul.addr %s510, 4
      %s512 = scalar_lea.vmem %s3, %s511
      // Predicated region
      $region33: #{up_forward.5} parent=31 // pred_check
        %p513 = pneg %p100
      $region34: #{up_forward.5} parent=31 // pred_check_branch
        %515 = sbr.rel (%p513) target = $region36
      $region35: #{up_forward.5} parent=31 // pred_region
        %s516 = smul.u32 32, %s14
      $region36: #{up_forward.5} parent=31 // pred_fallthru
        _
    $region32: #{up_forward.5} parent=5 // pred_fallthru
      _
    %p517 = scmp.le.s32.totalorder 2, %s9
    // Predicated region
    $region37: #{up_forward.5} parent=5 // pred_check
      %p518 = pneg %p517
    $region38: #{up_forward.5} parent=5 // pred_check_branch
      %520 = sbr.rel (%p518) target = $region40
    $region39: #{up_forward.5} parent=5 // pred_region
      %s521 = ssub.s32 %s9, 2
      // Predicated region
      $region41: #{up_forward.5} parent=39 // pred_check
        %p522 = pneg %p106
      $region42: #{up_forward.5} parent=39 // pred_check_branch
        %524 = sbr.rel (%p522) target = $region44
      $region43: #{up_forward.5} parent=39 // pred_region
        %s525 = smul.u32 32, %s15
        %p526 = scmp.lt.s32.totalorder %s525, 63
        %s527 = scalar_select %p526, %s525, 63
        %s528 = smul.addr %s527, 4
        %s529 = scalar_lea.vmem %s3, %s528
      $region44: #{up_forward.5} parent=39 // pred_fallthru
        _
    $region40: #{up_forward.5} parent=5 // pred_fallthru
      _
  $region6: #{up_forward.5} parent=0 // loop_footer
    %s13 = sadd.s32 1, %s9
  $region7: #{up_forward.5} parent=0 // loop_footer_branch
    %8 = sbr.rel target = $region3
  $region8: #{up_forward.5} parent=0 // loop_exit
    _

// kernel: up_forward.4
$region0: #{up_forward.4}
  #allocation0 [shape = 'u32[]', space=smem, size = 0x4, offset = 0x4, fixed_abs, tag = 'smem constant byte address 0x4 - core index']
  #allocation1 [shape = 'u32[144,128]{1,0:T(1,128)}', space=vmem, size = 0x12000, scoped, tag = 'internal scratch']
  #allocation2 [shape = 'f32[256,128]{1,0:T(8,128)}', space=vmem, size = 0x20000, scoped, tag = 'scratch operand']
  %s0 = inlined_call_operand.vmem [shape: bf16[512,128], index: 0, kind: input, shape index: {}]
  %s1 = inlined_call_operand.vmem [shape: bf16[128,128], index: 1, kind: input, shape index: {}]
  %s2 = inlined_call_operand.vmem [shape: bf16[512,128], index: 2, kind: output, shape index: {0}]
  %s3 = inlined_call_operand.vmem [shape: f32[16,128], index: 3, kind: output, shape index: {1}]
  %4 = xla_tuple %s2, %s3
  %s5 = sld [smem:[#allocation0]]
  $region57: #{up_forward.4} parent=0
    _
  %s7 = ssub.s32 1, %s5
  %s8 = scalar_select 0, %s7, %s5
  loop: start=0, step=1, limit=4
  $region2: #{up_forward.4} parent=0 // loop_pre_header
    _
  $region3: #{up_forward.4} parent=0 // loop_header
    %s10 = sphi 0, %s14
    %p11 = scmp.ge.s32.totalorder %s10, 4
    %s17 = sphi 0, %s29
    %s18 = sphi 0, %s25
    %s19 = sphi 0, %s17
    %s20 = sphi 0, %s18
    %s21 = sphi 0, %s19
    %s22 = sphi 0, %s20
    %s34 = sphi 0, %s36
    %s37 = sphi 0, %s34
    %s38 = sphi 0, %s37
    %s54 = sphi 0, %s38
    %s60 = sphi 0, %s62
    %s63 = sphi 0, %s60
    %s64 = sphi 0, %s63
    %s80 = sphi 0, %s64
    %s86 = sphi 0, %s88
    %s89 = sphi 0, %s86
    %s90 = sphi 0, %s89
    %s106 = sphi 0, %s90
    %s112 = sphi 0, %s114
    %s115 = sphi 0, %s112
    %s116 = sphi 0, %s115
    %s132 = sphi 0, %s116
  $region4: #{up_forward.4} parent=0 // loop_header_branch
    %13 = sbr.rel (%p11) target = $region8
  $region5: #{up_forward.4} parent=0 // loop_body
    %s15 = ssub.s32 %s10, 1
    %s16 = ssub.s32 %s10, 2
    %s23 = sadd.s32 1, %s18
    %p24 = scmp.ge.s32.totalorder %s23, 1
    %s25 = scalar_select %p24, 0, %s23
    %s26 = sadd.s32 1, %s17
    %s27 = scalar_select %p24, %s26, %s17
    %p28 = scmp.ge.s32.totalorder %s27, 2
    %s29 = scalar_select %p28, 0, %s27
    %s30 = ssub.s32 %s17, %s29
    %s31 = ssub.s32 %s18, %s25
    %s32 = sor.u32 %s30, %s31
    %p33 = scmp.eq.s32.totalorder %s32, 0
    %s35 = sadd.s32 %s34, 1
    %s36 = scalar_select %p33, %s34, %s35
    %p39 = pneg %p33
    %p40 = scmp.eq.s32.totalorder %s10, 1
    %p41 = por %p39, %p40
    %p42 = scmp.ne.s32.totalorder %s34, %s37
    %p43 = scmp.eq.s32.totalorder %s10, 0
    %p44 = por %p42, %p43
    %p45 = scmp.ne.s32.totalorder %s34, %s37
    %p46 = scmp.eq.s32.totalorder %s15, 1
    %p47 = por %p45, %p46
    %p48 = scmp.ne.s32.totalorder %s37, %s38
    %p49 = scmp.eq.s32.totalorder %s15, 0
    %p50 = por %p48, %p49
    %p51 = scmp.ne.s32.totalorder %s37, %s38
    %p52 = scmp.eq.s32.totalorder %s16, 1
    %p53 = por %p51, %p52
    %p55 = scmp.ne.s32.totalorder %s38, %s54
    %p56 = scmp.eq.s32.totalorder %s16, 0
    %p57 = por %p55, %p56
    %s58 = ssub.s32 %s18, %s25
    %p59 = scmp.eq.s32.totalorder %s58, 0
    %s61 = sadd.s32 %s60, 1
    %s62 = scalar_select %p59, %s60, %s61
    %p65 = pneg %p59
    %p66 = scmp.eq.s32.totalorder %s10, 1
    %p67 = por %p65, %p66
    %p68 = scmp.ne.s32.totalorder %s60, %s63
    %p69 = scmp.eq.s32.totalorder %s10, 0
    %p70 = por %p68, %p69
    %p71 = scmp.ne.s32.totalorder %s60, %s63
    %p72 = scmp.eq.s32.totalorder %s15, 1
    %p73 = por %p71, %p72
    %p74 = scmp.ne.s32.totalorder %s63, %s64
    %p75 = scmp.eq.s32.totalorder %s15, 0
    %p76 = por %p74, %p75
    %p77 = scmp.ne.s32.totalorder %s63, %s64
    %p78 = scmp.eq.s32.totalorder %s16, 1
    %p79 = por %p77, %p78
    %p81 = scmp.ne.s32.totalorder %s64, %s80
    %p82 = scmp.eq.s32.totalorder %s16, 0
    %p83 = por %p81, %p82
    %s84 = ssub.s32 %s17, %s29
    %p85 = scmp.eq.s32.totalorder %s84, 0
    %s87 = sadd.s32 %s86, 1
    %s88 = scalar_select %p85, %s86, %s87
    %p91 = pneg %p85
    %p92 = scmp.eq.s32.totalorder %s10, 1
    %p93 = por %p91, %p92
    %p94 = scmp.ne.s32.totalorder %s86, %s89
    %p95 = scmp.eq.s32.totalorder %s10, 0
    %p96 = por %p94, %p95
    %p97 = scmp.ne.s32.totalorder %s86, %s89
    %p98 = scmp.eq.s32.totalorder %s15, 1
    %p99 = por %p97, %p98
    %p100 = scmp.ne.s32.totalorder %s89, %s90
    %p101 = scmp.eq.s32.totalorder %s15, 0
    %p102 = por %p100, %p101
    %p103 = scmp.ne.s32.totalorder %s89, %s90
    %p104 = scmp.eq.s32.totalorder %s16, 1
    %p105 = por %p103, %p104
    %p107 = scmp.ne.s32.totalorder %s90, %s106
    %p108 = scmp.eq.s32.totalorder %s16, 0
    %p109 = por %p107, %p108
    %s110 = ssub.s32 %s17, %s29
    %p111 = scmp.eq.s32.totalorder %s110, 0
    %s113 = sadd.s32 %s112, 1
    %s114 = scalar_select %p111, %s112, %s113
    %p117 = pneg %p111
    %p118 = scmp.eq.s32.totalorder %s10, 1
    %p119 = por %p117, %p118
    %p120 = scmp.ne.s32.totalorder %s112, %s115
    %p121 = scmp.eq.s32.totalorder %s10, 0
    %p122 = por %p120, %p121
    %p123 = scmp.ne.s32.totalorder %s112, %s115
    %p124 = scmp.eq.s32.totalorder %s15, 1
    %p125 = por %p123, %p124
    %p126 = scmp.ne.s32.totalorder %s115, %s116
    %p127 = scmp.eq.s32.totalorder %s15, 0
    %p128 = por %p126, %p127
    %p129 = scmp.ne.s32.totalorder %s115, %s116
    %p130 = scmp.eq.s32.totalorder %s16, 1
    %p131 = por %p129, %p130
    %p133 = scmp.ne.s32.totalorder %s116, %s132
    %p134 = scmp.eq.s32.totalorder %s16, 0
    %p135 = por %p133, %p134
    %p136 = scmp.le.s32.totalorder 1, %s10
    %p137 = scmp.lt.s32.totalorder %s10, 3
    %p138 = pnand %p136, %p137
    %p139 = pneg %p138
    // Predicated region
    $region9: #{up_forward.4} parent=5 // pred_check
      _
    $region10: #{up_forward.4} parent=5 // pred_check_branch
      %141 = sbr.rel (%p138) target = $region12
    $region11: #{up_forward.4} parent=5 // pred_region
      %s142 = ssub.s32 %s10, 1
      // Predicated region
      $region13: #{up_forward.4} parent=11 // pred_check
        %p143 = pneg %p76
      $region14: #{up_forward.4} parent=11 // pred_check_branch
        %145 = sbr.rel (%p143) target = $region16
      $region15: #{up_forward.4} parent=11 // pred_region
        %s146 = smul.u32 16, %s20
        %p147 = scmp.lt.s32.totalorder %s146, 15
        %s148 = scalar_select %p147, %s146, 15
        %s149 = smul.addr %s148, 4
        %s150 = scalar_lea.vmem %s1, %s149
        %s151 = smul.u32 16, %s20
      $region16: #{up_forward.4} parent=11 // pred_fallthru
        _
    $region12: #{up_forward.4} parent=5 // pred_fallthru
      _
    %p152 = scmp.lt.s32.totalorder %s10, 2
    // Predicated region
    $region17: #{up_forward.4} parent=5 // pred_check
      %p153 = pneg %p152
    $region18: #{up_forward.4} parent=5 // pred_check_branch
      %155 = sbr.rel (%p153) target = $region20
    $region19: #{up_forward.4} parent=5 // pred_region
      // Predicated region
      $region21: #{up_forward.4} parent=19 // pred_check
        %p156 = pneg %p44
      $region22: #{up_forward.4} parent=19 // pred_check_branch
        %158 = sbr.rel (%p156) target = $region24
      $region23: #{up_forward.4} parent=19 // pred_region
        %s159 = smul.u32 32, %s17
        %p160 = scmp.lt.s32.totalorder %s159, 63
        %s161 = scalar_select %p160, %s159, 63
        %p162 = scmp.lt.s32.totalorder %s18, 0
        %s163 = scalar_select %p162, %s18, 0
        %s164 = sadd.s32 %s163, %s161
        %s165 = smul.addr %s164, 4
        %s166 = scalar_lea.vmem %s0, %s165
        %s167 = smul.u32 32, %s17
      $region24: #{up_forward.4} parent=19 // pred_fallthru
        _
    $region20: #{up_forward.4} parent=5 // pred_fallthru
      _
    %p168 = scmp.le.s32.totalorder 1, %s10
    %p169 = scmp.lt.s32.totalorder %s10, 3
    %p170 = pnand %p168, %p169
    %p171 = pneg %p170
    // Predicated region
    $region25: #{up_forward.4} parent=5 // pred_check
      _
    $region26: #{up_forward.4} parent=5 // pred_check_branch
      %173 = sbr.rel (%p170) target = $region28
    $region27: #{up_forward.4} parent=5 // pred_region
      %s174 = ssub.s32 %s10, 1
      %s175 = smul.u32 32, %s19
      %p176 = scmp.lt.s32.totalorder %s175, 63
      %s177 = scalar_select %p176, %s175, 63
      %p178 = scmp.lt.s32.totalorder %s20, 0
      %s179 = scalar_select %p178, %s20, 0
      %s180 = sadd.s32 %s179, %s177
      %s181 = smul.addr %s180, 4
      %s182 = scalar_lea.vmem %s0, %s181
      %p183 = pneg %p50
      %p184 = pneg %p47
      %s185 = smul.u32 16, %s20
      %p186 = scmp.lt.s32.totalorder %s185, 15
      %s187 = scalar_select %p186, %s185, 15
      %s188 = smul.addr %s187, 4
      %s189 = scalar_lea.vmem %s1, %s188
      %p190 = pneg %p76
      %p191 = pneg %p73
      %p192 = pneg %p102
      %p193 = pneg %p99
      %s194 = smul.u32 32, %s19
      %p195 = scmp.lt.s32.totalorder %s194, 63
      %s196 = scalar_select %p195, %s194, 63
      %s197 = smul.addr %s196, 4
      %s198 = scalar_lea.vmem %s2, %s197
      %p199 = pneg %p128
      %p200 = pneg %p125
      %p201 = scmp.lt.s32.totalorder %s19, 1
      %s202 = scalar_select %p201, %s19, 1
      %s203 = smul.addr %s202, 8
      %s204 = scalar_lea.vmem %s3, %s203
      %s205 = smul.u32 32, %s19
      %p206 = scmp.lt.s32.totalorder %s205, 63
      %s207 = scalar_select %p206, %s205, 63
      %p208 = scmp.lt.s32.totalorder %s20, 0
      %s209 = scalar_select %p208, %s20, 0
      %s210 = sadd.s32 %s209, %s207
      %s211 = smul.addr %s210, 4
      %s212 = scalar_lea.vmem %s0, %s211
      %s213 = smul.u32 32, %s19
      %s214 = smul.u32 16, %s20
      %p215 = scmp.lt.s32.totalorder %s214, 15
      %s216 = scalar_select %p215, %s214, 15
      %s217 = smul.addr %s216, 4
      %s218 = scalar_lea.vmem %s1, %s217
      %s219 = smul.u32 16, %s20
      %s220 = smul.u32 32, %s19
      %p221 = scmp.lt.s32.totalorder %s220, 63
      %s222 = scalar_select %p221, %s220, 63
      %s223 = smul.addr %s222, 4
      %s224 = scalar_lea.vmem %s2, %s223
      %s225 = smul.u32 32, %s19
      %p226 = scmp.lt.s32.totalorder %s19, 1
      %s227 = scalar_select %p226, %s19, 1
      %s228 = smul.addr %s227, 8
      %s229 = scalar_lea.vmem %s3, %s228
      %p231 = scmp.eq.s32.totalorder %s20, 0
      // Predicated region
      $region29: #{up_forward.4} parent=27 // pred_check
        %p232 = pneg %p231
      $region30: #{up_forward.4} parent=27 // pred_check_branch
        %234 = sbr.rel (%p232) target = $region32
      $region31: #{up_forward.4} parent=27 // pred_region
        %235 = vst [vmem:[#allocation2] sm:$0xff] 0.0
        %236 = vst [vmem:[#allocation2 + $0x8] sm:$0xff] 0.0
        %237 = vst [vmem:[#allocation2 + $0x10] sm:$0xff] 0.0
        %238 = vst [vmem:[#allocation2 + $0x18] sm:$0xff] 0.0
        %239 = vst [vmem:[#allocation2 + $0x20] sm:$0xff] 0.0
        %240 = vst [vmem:[#allocation2 + $0x28] sm:$0xff] 0.0
        %241 = vst [vmem:[#allocation2 + $0x30] sm:$0xff] 0.0
        %242 = vst [vmem:[#allocation2 + $0x38] sm:$0xff] 0.0
        %243 = vst [vmem:[#allocation2 + $0x40] sm:$0xff] 0.0
        %244 = vst [vmem:[#allocation2 + $0x48] sm:$0xff] 0.0
        %245 = vst [vmem:[#allocation2 + $0x50] sm:$0xff] 0.0
        %246 = vst [vmem:[#allocation2 + $0x58] sm:$0xff] 0.0
        %247 = vst [vmem:[#allocation2 + $0x60] sm:$0xff] 0.0
        %248 = vst [vmem:[#allocation2 + $0x68] sm:$0xff] 0.0
        %249 = vst [vmem:[#allocation2 + $0x70] sm:$0xff] 0.0
        %250 = vst [vmem:[#allocation2 + $0x78] sm:$0xff] 0.0
        %251 = vst [vmem:[#allocation2 + $0x80] sm:$0xff] 0.0
        %252 = vst [vmem:[#allocation2 + $0x88] sm:$0xff] 0.0
        %253 = vst [vmem:[#allocation2 + $0x90] sm:$0xff] 0.0
        %254 = vst [vmem:[#allocation2 + $0x98] sm:$0xff] 0.0
        %255 = vst [vmem:[#allocation2 + $0xa0] sm:$0xff] 0.0
        %256 = vst [vmem:[#allocation2 + $0xa8] sm:$0xff] 0.0
        %257 = vst [vmem:[#allocation2 + $0xb0] sm:$0xff] 0.0
        %258 = vst [vmem:[#allocation2 + $0xb8] sm:$0xff] 0.0
        %259 = vst [vmem:[#allocation2 + $0xc0] sm:$0xff] 0.0
        %260 = vst [vmem:[#allocation2 + $0xc8] sm:$0xff] 0.0
        %261 = vst [vmem:[#allocation2 + $0xd0] sm:$0xff] 0.0
        %262 = vst [vmem:[#allocation2 + $0xd8] sm:$0xff] 0.0
        %263 = vst [vmem:[#allocation2 + $0xe0] sm:$0xff] 0.0
        %264 = vst [vmem:[#allocation2 + $0xe8] sm:$0xff] 0.0
        %265 = vst [vmem:[#allocation2 + $0xf0] sm:$0xff] 0.0
        %266 = vst [vmem:[#allocation2 + $0xf8] sm:$0xff] 0.0
      $region32: #{up_forward.4} parent=27 // pred_fallthru
        _
      %v267 = vld [vmem:[#allocation2] sm:$0xff]
      %v268 = vld [vmem:[#allocation2 + $0x8] sm:$0xff]
      %v269 = vld [vmem:[#allocation2 + $0x10] sm:$0xff]
      %v270 = vld [vmem:[#allocation2 + $0x18] sm:$0xff]
      %v271 = vld [vmem:[#allocation2 + $0x20] sm:$0xff]
      %v272 = vld [vmem:[#allocation2 + $0x28] sm:$0xff]
      %v273 = vld [vmem:[#allocation2 + $0x30] sm:$0xff]
      %v274 = vld [vmem:[#allocation2 + $0x38] sm:$0xff]
      %v275 = vld [vmem:[#allocation2 + $0x40] sm:$0xff]
      %v276 = vld [vmem:[#allocation2 + $0x48] sm:$0xff]
      %v277 = vld [vmem:[#allocation2 + $0x50] sm:$0xff]
      %v278 = vld [vmem:[#allocation2 + $0x58] sm:$0xff]
      %v279 = vld [vmem:[#allocation2 + $0x60] sm:$0xff]
      %v280 = vld [vmem:[#allocation2 + $0x68] sm:$0xff]
      %v281 = vld [vmem:[#allocation2 + $0x70] sm:$0xff]
      %v282 = vld [vmem:[#allocation2 + $0x78] sm:$0xff]
      %v283 = vld [vmem:[#allocation2 + $0x80] sm:$0xff]
      %v284 = vld [vmem:[#allocation2 + $0x88] sm:$0xff]
      %v285 = vld [vmem:[#allocation2 + $0x90] sm:$0xff]
      %v286 = vld [vmem:[#allocation2 + $0x98] sm:$0xff]
      %v287 = vld [vmem:[#allocation2 + $0xa0] sm:$0xff]
      %v288 = vld [vmem:[#allocation2 + $0xa8] sm:$0xff]
      %v289 = vld [vmem:[#allocation2 + $0xb0] sm:$0xff]
      %v290 = vld [vmem:[#allocation2 + $0xb8] sm:$0xff]
      %v291 = vld [vmem:[#allocation2 + $0xc0] sm:$0xff]
      %v292 = vld [vmem:[#allocation2 + $0xc8] sm:$0xff]
      %v293 = vld [vmem:[#allocation2 + $0xd0] sm:$0xff]
      %v294 = vld [vmem:[#allocation2 + $0xd8] sm:$0xff]
      %v295 = vld [vmem:[#allocation2 + $0xe0] sm:$0xff]
      %v296 = vld [vmem:[#allocation2 + $0xe8] sm:$0xff]
      %v297 = vld [vmem:[#allocation2 + $0xf0] sm:$0xff]
      %v298 = vld [vmem:[#allocation2 + $0xf8] sm:$0xff]
      %v299 = vld [vmem:[%s212] sm:$0xf]
      %v300 = vld [vmem:[%s212 + $0x4] sm:$0xf]
      %v301 = vld [vmem:[%s212 + $0x8] sm:$0xf]
      %v302 = vld [vmem:[%s212 + $0xc] sm:$0xf]
      %v303 = vld [vmem:[%s212 + $0x10] sm:$0xf]
      %v304 = vld [vmem:[%s212 + $0x14] sm:$0xf]
      %v305 = vld [vmem:[%s212 + $0x18] sm:$0xf]
      %v306 = vld [vmem:[%s212 + $0x1c] sm:$0xf]
      %v307 = vld [vmem:[%s212 + $0x20] sm:$0xf]
      %v308 = vld [vmem:[%s212 + $0x24] sm:$0xf]
      %v309 = vld [vmem:[%s212 + $0x28] sm:$0xf]
      %v310 = vld [vmem:[%s212 + $0x2c] sm:$0xf]
      %v311 = vld [vmem:[%s212 + $0x30] sm:$0xf]
      %v312 = vld [vmem:[%s212 + $0x34] sm:$0xf]
      %v313 = vld [vmem:[%s212 + $0x38] sm:$0xf]
      %v314 = vld [vmem:[%s212 + $0x3c] sm:$0xf]
      %v315 = vld [vmem:[%s212 + $0x40] sm:$0xf]
      %v316 = vld [vmem:[%s212 + $0x44] sm:$0xf]
      %v317 = vld [vmem:[%s212 + $0x48] sm:$0xf]
      %v318 = vld [vmem:[%s212 + $0x4c] sm:$0xf]
      %v319 = vld [vmem:[%s212 + $0x50] sm:$0xf]
      %v320 = vld [vmem:[%s212 + $0x54] sm:$0xf]
      %v321 = vld [vmem:[%s212 + $0x58] sm:$0xf]
      %v322 = vld [vmem:[%s212 + $0x5c] sm:$0xf]
      %v323 = vld [vmem:[%s212 + $0x60] sm:$0xf]
      %v324 = vld [vmem:[%s212 + $0x64] sm:$0xf]
      %v325 = vld [vmem:[%s212 + $0x68] sm:$0xf]
      %v326 = vld [vmem:[%s212 + $0x6c] sm:$0xf]
      %v327 = vld [vmem:[%s212 + $0x70] sm:$0xf]
      %v328 = vld [vmem:[%s212 + $0x74] sm:$0xf]
      %v329 = vld [vmem:[%s212 + $0x78] sm:$0xf]
      %v330 = vld [vmem:[%s212 + $0x7c] sm:$0xf]
      %v331 = vld [vmem:[%s218] sm:$0xf]
      %v332 = vld [vmem:[%s218 + $0x4] sm:$0xf]
      %v333 = vld [vmem:[%s218 + $0x8] sm:$0xf]
      %v334 = vld [vmem:[%s218 + $0xc] sm:$0xf]
      %v335 = vld [vmem:[%s218 + $0x10] sm:$0xf]
      %v336 = vld [vmem:[%s218 + $0x14] sm:$0xf]
      %v337 = vld [vmem:[%s218 + $0x18] sm:$0xf]
      %v338 = vld [vmem:[%s218 + $0x1c] sm:$0xf]
      %v339 = vld [vmem:[%s218 + $0x20] sm:$0xf]
      %v340 = vld [vmem:[%s218 + $0x24] sm:$0xf]
      %v341 = vld [vmem:[%s218 + $0x28] sm:$0xf]
      %v342 = vld [vmem:[%s218 + $0x2c] sm:$0xf]
      %v343 = vld [vmem:[%s218 + $0x30] sm:$0xf]
      %v344 = vld [vmem:[%s218 + $0x34] sm:$0xf]
      %v345 = vld [vmem:[%s218 + $0x38] sm:$0xf]
      %v346 = vld [vmem:[%s218 + $0x3c] sm:$0xf]
      %v379 = vunpack.c.l.b16 %v299
      %v380 = vunpack.c.l.b16 %v300
      %v381 = vunpack.c.l.b16 %v301
      %v382 = vunpack.c.l.b16 %v302
      %v383 = vunpack.c.l.b16 %v303
      %v384 = vunpack.c.l.b16 %v304
      %v385 = vunpack.c.l.b16 %v305
      %v386 = vunpack.c.l.b16 %v306
      %v387 = vunpack.c.l.b16 %v307
      %v388 = vunpack.c.l.b16 %v308
      %v389 = vunpack.c.l.b16 %v309
      %v390 = vunpack.c.l.b16 %v310
      %v391 = vunpack.c.l.b16 %v311
      %v392 = vunpack.c.l.b16 %v312
      %v393 = vunpack.c.l.b16 %v313
      %v394 = vunpack.c.l.b16 %v314
      %v395 = vunpack.c.l.b16 %v315
      %v396 = vunpack.c.l.b16 %v316
      %v397 = vunpack.c.l.b16 %v317
      %v398 = vunpack.c.l.b16 %v318
      %v399 = vunpack.c.l.b16 %v319
      %v400 = vunpack.c.l.b16 %v320
      %v401 = vunpack.c.l.b16 %v321
      %v402 = vunpack.c.l.b16 %v322
      %v403 = vunpack.c.l.b16 %v323
      %v404 = vunpack.c.l.b16 %v324
      %v405 = vunpack.c.l.b16 %v325
      %v406 = vunpack.c.l.b16 %v326
      %v407 = vunpack.c.l.b16 %v327
      %v408 = vunpack.c.l.b16 %v328
      %v409 = vunpack.c.l.b16 %v329
      %v410 = vunpack.c.l.b16 %v330
      %v411 = vpack.c.b16 %v380, %v379
      %v412 = vpack.c.b16 %v382, %v381
      %v413 = vpack.c.b16 %v384, %v383
      %v414 = vpack.c.b16 %v386, %v385
      %v415 = vpack.c.b16 %v388, %v387
      %v416 = vpack.c.b16 %v390, %v389
      %v417 = vpack.c.b16 %v392, %v391
      %v418 = vpack.c.b16 %v394, %v393
      %v419 = vpack.c.b16 %v396, %v395
      %v420 = vpack.c.b16 %v398, %v397
      %v421 = vpack.c.b16 %v400, %v399
      %v422 = vpack.c.b16 %v402, %v401
      %v423 = vpack.c.b16 %v404, %v403
      %v424 = vpack.c.b16 %v406, %v405
      %v425 = vpack.c.b16 %v408, %v407
      %v426 = vpack.c.b16 %v410, %v409
      %v459 = vunpack.c.l.b16 %v331
      %v460 = vunpack.c.l.b16 %v332
      %v461 = vunpack.c.l.b16 %v333
      %v462 = vunpack.c.l.b16 %v334
      %v463 = vunpack.c.l.b16 %v335
      %v464 = vunpack.c.l.b16 %v336
      %v465 = vunpack.c.l.b16 %v337
      %v466 = vunpack.c.l.b16 %v338
      %v467 = vunpack.c.l.b16 %v339
      %v468 = vunpack.c.l.b16 %v340
      %v469 = vunpack.c.l.b16 %v341
      %v470 = vunpack.c.l.b16 %v342
      %v471 = vunpack.c.l.b16 %v343
      %v472 = vunpack.c.l.b16 %v344
      %v473 = vunpack.c.l.b16 %v345
      %v474 = vunpack.c.l.b16 %v346
      %v475 = vpack.c.b16 %v460, %v459
      %v476 = vpack.c.b16 %v462, %v461
      %v477 = vpack.c.b16 %v464, %v463
      %v478 = vpack.c.b16 %v466, %v465
      %v479 = vpack.c.b16 %v468, %v467
      %v480 = vpack.c.b16 %v470, %v469
      %v481 = vpack.c.b16 %v472, %v471
      %v482 = vpack.c.b16 %v474, %v473
      %491 = vmatprep.subr.bf16.mxu0 0
      %492 = vmatpush1.bf16.msra.mxu0 %v475
      %493 = vmatprep.subr.bf16.mxu0 0
      %494 = vmatpush1.bf16.msra.mxu0 %v476
      %495 = vmatprep.subr.bf16.mxu0 0
      %496 = vmatpush1.bf16.msra.mxu0 %v477
      %497 = vmatprep.subr.bf16.mxu0 0
      %498 = vmatpush1.bf16.msra.mxu0 %v478
      %499 = vmatprep.subr.bf16.mxu0 0
      %500 = vmatpush1.bf16.msra.mxu0 %v479
      %501 = vmatprep.subr.bf16.mxu0 0
      %502 = vmatpush1.bf16.msra.mxu0 %v480
      %503 = vmatprep.subr.bf16.mxu0 0
      %504 = vmatpush1.bf16.msra.mxu0 %v481
      %505 = vmatprep.subr.bf16.mxu0 0
      %506 = vmatpush1.bf16.msra.mxu0 %v482
      %507 = vmatprep.subr.bf16.mxu0 0
      %508 = vmatpush1.bf16.msra.mxu0 0
      %509 = vmatprep.subr.bf16.mxu0 0
      %510 = vmatpush1.bf16.msra.mxu0 0
      %511 = vmatprep.subr.bf16.mxu0 0
      %512 = vmatpush1.bf16.msra.mxu0 0
      %513 = vmatprep.subr.bf16.mxu0 0
      %514 = vmatpush1.bf16.msra.mxu0 0
      %515 = vmatprep.subr.bf16.mxu0 0
      %516 = vmatpush1.bf16.msra.mxu0 0
      %517 = vmatprep.subr.bf16.mxu0 0
      %518 = vmatpush1.bf16.msra.mxu0 0
      %519 = vmatprep.subr.bf16.mxu0 0
      %520 = vmatpush1.bf16.msra.mxu0 0
      %521 = vmatprep.subr.bf16.mxu0 0
      %522 = vmatpush1.bf16.msra.mxu0 0
      %523 = vmatprep.mubr.bf16.mxu0 0
      %524 = vmatmul.mubr.bf16.gmra.mrb[0].mxu0 %v411
      %v525 = vpop.f32.mrb[0].mxu0
      %v526 = vadd.f32 0.0, %v525
      %v527 = vpop.f32.mrb[0].mxu0
      %v528 = vpop.f32.mrb[0].mxu0
      %v529 = vadd.f32 0.0, %v528
      %v530 = vpop.f32.mrb[0].mxu0
      %531 = vmatprep.mubr.bf16.mxu0 0
      %532 = vmatmul.mubr.bf16.gmra.mrb[0].mxu0 %v412
      %v533 = vpop.f32.mrb[0].mxu0
      %v534 = vadd.f32 0.0, %v533
      %v535 = vpop.f32.mrb[0].mxu0
      %v536 = vpop.f32.mrb[0].mxu0
      %v537 = vadd.f32 0.0, %v536
      %v538 = vpop.f32.mrb[0].mxu0
      %539 = vmatprep.mubr.bf16.mxu0 0
      %540 = vmatmul.mubr.bf16.gmra.mrb[0].mxu0 %v413
      %v541 = vpop.f32.mrb[0].mxu0
      %v542 = vadd.f32 0.0, %v541
      %v543 = vpop.f32.mrb[0].mxu0
      %v544 = vpop.f32.mrb[0].mxu0
      %v545 = vadd.f32 0.0, %v544
      %v546 = vpop.f32.mrb[0].mxu0
      %547 = vmatprep.mubr.bf16.mxu0 0
      %548 = vmatmul.mubr.bf16.gmra.mrb[0].mxu0 %v414
      %v549 = vpop.f32.mrb[0].mxu0
      %v550 = vadd.f32 0.0, %v549
      %v551 = vpop.f32.mrb[0].mxu0
      %v552 = vpop.f32.mrb[0].mxu0
      %v553 = vadd.f32 0.0, %v552
      %v554 = vpop.f32.mrb[0].mxu0
      %555 = vmatprep.mubr.bf16.mxu0 0
      %556 = vmatmul.mubr.bf16.gmra.mrb[0].mxu0 %v415
      %v557 = vpop.f32.mrb[0].mxu0
      %v558 = vadd.f32 0.0, %v557
      %v559 = vpop.f32.mrb[0].mxu0
      %v560 = vpop.f32.mrb[0].mxu0
      %v561 = vadd.f32 0.0, %v560
      %v562 = vpop.f32.mrb[0].mxu0
      %563 = vmatprep.mubr.bf16.mxu0 0
      %564 = vmatmul.mubr.bf16.gmra.mrb[0].mxu0 %v416
      %v565 = vpop.f32.mrb[0].mxu0
      %v566 = vadd.f32 0.0, %v565
      %v567 = vpop.f32.mrb[0].mxu0
      %v568 = vpop.f32.mrb[0].mxu0
      %v569 = vadd.f32 0.0, %v568
      %v570 = vpop.f32.mrb[0].mxu0
      %571 = vmatprep.mubr.bf16.mxu0 0
      %572 = vmatmul.mubr.bf16.gmra.mrb[0].mxu0 %v417
      %v573 = vpop.f32.mrb[0].mxu0
      %v574 = vadd.f32 0.0, %v573
      %v575 = vpop.f32.mrb[0].mxu0
      %v576 = vpop.f32.mrb[0].mxu0
      %v577 = vadd.f32 0.0, %v576
      %v578 = vpop.f32.mrb[0].mxu0
      %579 = vmatprep.mubr.bf16.mxu0 0
      %580 = vmatmul.mubr.bf16.gmra.mrb[0].mxu0 %v418
      %v581 = vpop.f32.mrb[0].mxu0
      %v582 = vadd.f32 0.0, %v581
      %v583 = vpop.f32.mrb[0].mxu0
      %v584 = vpop.f32.mrb[0].mxu0
      %v585 = vadd.f32 0.0, %v584
      %v586 = vpop.f32.mrb[0].mxu0
      %587 = vmatprep.mubr.bf16.mxu0 0
      %588 = vmatmul.mubr.bf16.gmra.mrb[0].mxu0 %v419
      %v589 = vpop.f32.mrb[0].mxu0
      %v590 = vadd.f32 0.0, %v589
      %v591 = vpop.f32.mrb[0].mxu0
      %v592 = vpop.f32.mrb[0].mxu0
      %v593 = vadd.f32 0.0, %v592
      %v594 = vpop.f32.mrb[0].mxu0
      %595 = vmatprep.mubr.bf16.mxu0 0
      %596 = vmatmul.mubr.bf16.gmra.mrb[0].mxu0 %v420
      %v597 = vpop.f32.mrb[0].mxu0
      %v598 = vadd.f32 0.0, %v597
      %v599 = vpop.f32.mrb[0].mxu0
      %v600 = vpop.f32.mrb[0].mxu0
      %v601 = vadd.f32 0.0, %v600
      %v602 = vpop.f32.mrb[0].mxu0
      %603 = vmatprep.mubr.bf16.mxu0 0
      %604 = vmatmul.mubr.bf16.gmra.mrb[0].mxu0 %v421
      %v605 = vpop.f32.mrb[0].mxu0
      %v606 = vadd.f32 0.0, %v605
      %v607 = vpop.f32.mrb[0].mxu0
      %v608 = vpop.f32.mrb[0].mxu0
      %v609 = vadd.f32 0.0, %v608
      %v610 = vpop.f32.mrb[0].mxu0
      %611 = vmatprep.mubr.bf16.mxu0 0
      %612 = vmatmul.mubr.bf16.gmra.mrb[0].mxu0 %v422
      %v613 = vpop.f32.mrb[0].mxu0
      %v614 = vadd.f32 0.0, %v613
      %v615 = vpop.f32.mrb[0].mxu0
      %v616 = vpop.f32.mrb[0].mxu0
      %v617 = vadd.f32 0.0, %v616
      %v618 = vpop.f32.mrb[0].mxu0
      %619 = vmatprep.mubr.bf16.mxu0 0
      %620 = vmatmul.mubr.bf16.gmra.mrb[0].mxu0 %v423
      %v621 = vpop.f32.mrb[0].mxu0
      %v622 = vadd.f32 0.0, %v621
      %v623 = vpop.f32.mrb[0].mxu0
      %v624 = vpop.f32.mrb[0].mxu0
      %v625 = vadd.f32 0.0, %v624
      %v626 = vpop.f32.mrb[0].mxu0
      %627 = vmatprep.mubr.bf16.mxu0 0
      %628 = vmatmul.mubr.bf16.gmra.mrb[0].mxu0 %v424
      %v629 = vpop.f32.mrb[0].mxu0
      %v630 = vadd.f32 0.0, %v629
      %v631 = vpop.f32.mrb[0].mxu0
      %v632 = vpop.f32.mrb[0].mxu0
      %v633 = vadd.f32 0.0, %v632
      %v634 = vpop.f32.mrb[0].mxu0
      %635 = vmatprep.mubr.bf16.mxu0 0
      %636 = vmatmul.mubr.bf16.gmra.mrb[0].mxu0 %v425
      %v637 = vpop.f32.mrb[0].mxu0
      %v638 = vadd.f32 0.0, %v637
      %v639 = vpop.f32.mrb[0].mxu0
      %v640 = vpop.f32.mrb[0].mxu0
      %v641 = vadd.f32 0.0, %v640
      %v642 = vpop.f32.mrb[0].mxu0
      %643 = vmatprep.mubr.bf16.mxu0 0
      %644 = vmatmul.mubr.bf16.gmra.mrb[0].mxu0 %v426
      %v645 = vpop.f32.mrb[0].mxu0
      %v646 = vadd.f32 0.0, %v645
      %v647 = vpop.f32.mrb[0].mxu0
      %v648 = vpop.f32.mrb[0].mxu0
      %v649 = vadd.f32 0.0, %v648
      %v650 = vpop.f32.mrb[0].mxu0
      %651 = vdwg.mxu0
      %v652 = vadd.f32 %v267, %v526
      %v653 = vadd.f32 %v268, %v529
      %v654 = vadd.f32 %v269, %v534
      %v655 = vadd.f32 %v270, %v537
      %v656 = vadd.f32 %v271, %v542
      %v657 = vadd.f32 %v272, %v545
      %v658 = vadd.f32 %v273, %v550
      %v659 = vadd.f32 %v274, %v553
      %v660 = vadd.f32 %v275, %v558
      %v661 = vadd.f32 %v276, %v561
      %v662 = vadd.f32 %v277, %v566
      %v663 = vadd.f32 %v278, %v569
      %v664 = vadd.f32 %v279, %v574
      %v665 = vadd.f32 %v280, %v577
      %v666 = vadd.f32 %v281, %v582
      %v667 = vadd.f32 %v282, %v585
      %v668 = vadd.f32 %v283, %v590
      %v669 = vadd.f32 %v284, %v593
      %v670 = vadd.f32 %v285, %v598
      %v671 = vadd.f32 %v286, %v601
      %v672 = vadd.f32 %v287, %v606
      %v673 = vadd.f32 %v288, %v609
      %v674 = vadd.f32 %v289, %v614
      %v675 = vadd.f32 %v290, %v617
      %v676 = vadd.f32 %v291, %v622
      %v677 = vadd.f32 %v292, %v625
      %v678 = vadd.f32 %v293, %v630
      %v679 = vadd.f32 %v294, %v633
      %v680 = vadd.f32 %v295, %v638
      %v681 = vadd.f32 %v296, %v641
      %v682 = vadd.f32 %v297, %v646
      %v683 = vadd.f32 %v298, %v649
      %684 = vst [vmem:[#allocation2] sm:$0xff] %v652
      %685 = vst [vmem:[#allocation2 + $0x8] sm:$0xff] %v653
      %686 = vst [vmem:[#allocation2 + $0x10] sm:$0xff] %v654
      %687 = vst [vmem:[#allocation2 + $0x18] sm:$0xff] %v655
      %688 = vst [vmem:[#allocation2 + $0x20] sm:$0xff] %v656
      %689 = vst [vmem:[#allocation2 + $0x28] sm:$0xff] %v657
      %690 = vst [vmem:[#allocation2 + $0x30] sm:$0xff] %v658
      %691 = vst [vmem:[#allocation2 + $0x38] sm:$0xff] %v659
      %692 = vst [vmem:[#allocation2 + $0x40] sm:$0xff] %v660
      %693 = vst [vmem:[#allocation2 + $0x48] sm:$0xff] %v661
      %694 = vst [vmem:[#allocation2 + $0x50] sm:$0xff] %v662
      %695 = vst [vmem:[#allocation2 + $0x58] sm:$0xff] %v663
      %696 = vst [vmem:[#allocation2 + $0x60] sm:$0xff] %v664
      %697 = vst [vmem:[#allocation2 + $0x68] sm:$0xff] %v665
      %698 = vst [vmem:[#allocation2 + $0x70] sm:$0xff] %v666
      %699 = vst [vmem:[#allocation2 + $0x78] sm:$0xff] %v667
      %700 = vst [vmem:[#allocation2 + $0x80] sm:$0xff] %v668
      %701 = vst [vmem:[#allocation2 + $0x88] sm:$0xff] %v669
      %702 = vst [vmem:[#allocation2 + $0x90] sm:$0xff] %v670
      %703 = vst [vmem:[#allocation2 + $0x98] sm:$0xff] %v671
      %704 = vst [vmem:[#allocation2 + $0xa0] sm:$0xff] %v672
      %705 = vst [vmem:[#allocation2 + $0xa8] sm:$0xff] %v673
      %706 = vst [vmem:[#allocation2 + $0xb0] sm:$0xff] %v674
      %707 = vst [vmem:[#allocation2 + $0xb8] sm:$0xff] %v675
      %708 = vst [vmem:[#allocation2 + $0xc0] sm:$0xff] %v676
      %709 = vst [vmem:[#allocation2 + $0xc8] sm:$0xff] %v677
      %710 = vst [vmem:[#allocation2 + $0xd0] sm:$0xff] %v678
      %711 = vst [vmem:[#allocation2 + $0xd8] sm:$0xff] %v679
      %712 = vst [vmem:[#allocation2 + $0xe0] sm:$0xff] %v680
      %713 = vst [vmem:[#allocation2 + $0xe8] sm:$0xff] %v681
      %714 = vst [vmem:[#allocation2 + $0xf0] sm:$0xff] %v682
      %715 = vst [vmem:[#allocation2 + $0xf8] sm:$0xff] %v683
      // Predicated region
      $region33: #{up_forward.4} parent=27 // pred_check
        %p716 = pneg %p231
      $region34: #{up_forward.4} parent=27 // pred_check_branch
        %718 = sbr.rel (%p716) target = $region36
      $region35: #{up_forward.4} parent=27 // pred_region
        %v719 = vld [vmem:[#allocation2] sm:$0xff]
        %v720 = vld [vmem:[#allocation2 + $0x8] sm:$0xff]
        %v721 = vld [vmem:[#allocation2 + $0x10] sm:$0xff]
        %v722 = vld [vmem:[#allocation2 + $0x18] sm:$0xff]
        %v723 = vld [vmem:[#allocation2 + $0x20] sm:$0xff]
        %v724 = vld [vmem:[#allocation2 + $0x28] sm:$0xff]
        %v725 = vld [vmem:[#allocation2 + $0x30] sm:$0xff]
        %v726 = vld [vmem:[#allocation2 + $0x38] sm:$0xff]
        %v727 = vld [vmem:[#allocation2 + $0x40] sm:$0xff]
        %v728 = vld [vmem:[#allocation2 + $0x48] sm:$0xff]
        %v729 = vld [vmem:[#allocation2 + $0x50] sm:$0xff]
        %v730 = vld [vmem:[#allocation2 + $0x58] sm:$0xff]
        %v731 = vld [vmem:[#allocation2 + $0x60] sm:$0xff]
        %v732 = vld [vmem:[#allocation2 + $0x68] sm:$0xff]
        %v733 = vld [vmem:[#allocation2 + $0x70] sm:$0xff]
        %v734 = vld [vmem:[#allocation2 + $0x78] sm:$0xff]
        %v735 = vld [vmem:[#allocation2 + $0x80] sm:$0xff]
        %v736 = vld [vmem:[#allocation2 + $0x88] sm:$0xff]
        %v737 = vld [vmem:[#allocation2 + $0x90] sm:$0xff]
        %v738 = vld [vmem:[#allocation2 + $0x98] sm:$0xff]
        %v739 = vld [vmem:[#allocation2 + $0xa0] sm:$0xff]
        %v740 = vld [vmem:[#allocation2 + $0xa8] sm:$0xff]
        %v741 = vld [vmem:[#allocation2 + $0xb0] sm:$0xff]
        %v742 = vld [vmem:[#allocation2 + $0xb8] sm:$0xff]
        %v743 = vld [vmem:[#allocation2 + $0xc0] sm:$0xff]
        %v744 = vld [vmem:[#allocation2 + $0xc8] sm:$0xff]
        %v745 = vld [vmem:[#allocation2 + $0xd0] sm:$0xff]
        %v746 = vld [vmem:[#allocation2 + $0xd8] sm:$0xff]
        %v747 = vld [vmem:[#allocation2 + $0xe0] sm:$0xff]
        %v748 = vld [vmem:[#allocation2 + $0xe8] sm:$0xff]
        %v749 = vld [vmem:[#allocation2 + $0xf0] sm:$0xff]
        %v750 = vld [vmem:[#allocation2 + $0xf8] sm:$0xff]
        %v751 = vpack.c.bf16 %v720, %v719
        %v752 = vpack.c.bf16 %v722, %v721
        %v753 = vpack.c.bf16 %v724, %v723
        %v754 = vpack.c.bf16 %v726, %v725
        %v755 = vpack.c.bf16 %v728, %v727
        %v756 = vpack.c.bf16 %v730, %v729
        %v757 = vpack.c.bf16 %v732, %v731
        %v758 = vpack.c.bf16 %v734, %v733
        %v759 = vpack.c.bf16 %v736, %v735
        %v760 = vpack.c.bf16 %v738, %v737
        %v761 = vpack.c.bf16 %v740, %v739
        %v762 = vpack.c.bf16 %v742, %v741
        %v763 = vpack.c.bf16 %v744, %v743
        %v764 = vpack.c.bf16 %v746, %v745
        %v765 = vpack.c.bf16 %v748, %v747
        %v766 = vpack.c.bf16 %v750, %v749
        %v783 = vunpack.c.l.b16 %v751
        %v784 = vunpack.c.h.b16 %v751
        %v785 = vunpack.c.l.b16 %v752
        %v786 = vunpack.c.h.b16 %v752
        %v787 = vunpack.c.l.b16 %v753
        %v788 = vunpack.c.h.b16 %v753
        %v789 = vunpack.c.l.b16 %v754
        %v790 = vunpack.c.h.b16 %v754
        %v791 = vunpack.c.l.b16 %v755
        %v792 = vunpack.c.h.b16 %v755
        %v793 = vunpack.c.l.b16 %v756
        %v794 = vunpack.c.h.b16 %v756
        %v795 = vunpack.c.l.b16 %v757
        %v796 = vunpack.c.h.b16 %v757
        %v797 = vunpack.c.l.b16 %v758
        %v798 = vunpack.c.h.b16 %v758
        %v799 = vunpack.c.l.b16 %v759
        %v800 = vunpack.c.h.b16 %v759
        %v801 = vunpack.c.l.b16 %v760
        %v802 = vunpack.c.h.b16 %v760
        %v803 = vunpack.c.l.b16 %v761
        %v804 = vunpack.c.h.b16 %v761
        %v805 = vunpack.c.l.b16 %v762
        %v806 = vunpack.c.h.b16 %v762
        %v807 = vunpack.c.l.b16 %v763
        %v808 = vunpack.c.h.b16 %v763
        %v809 = vunpack.c.l.b16 %v764
        %v810 = vunpack.c.h.b16 %v764
        %v811 = vunpack.c.l.b16 %v765
        %v812 = vunpack.c.h.b16 %v765
        %v813 = vunpack.c.l.b16 %v766
        %v814 = vunpack.c.h.b16 %v766
        %v815 = vpack.c.b16 %v783, %v783
        %v816 = vpack.c.b16 %v784, %v784
        %v817 = vpack.c.b16 %v785, %v785
        %v818 = vpack.c.b16 %v786, %v786
        %v819 = vpack.c.b16 %v787, %v787
        %v820 = vpack.c.b16 %v788, %v788
        %v821 = vpack.c.b16 %v789, %v789
        %v822 = vpack.c.b16 %v790, %v790
        %v823 = vpack.c.b16 %v791, %v791
        %v824 = vpack.c.b16 %v792, %v792
        %v825 = vpack.c.b16 %v793, %v793
        %v826 = vpack.c.b16 %v794, %v794
        %v827 = vpack.c.b16 %v795, %v795
        %v828 = vpack.c.b16 %v796, %v796
        %v829 = vpack.c.b16 %v797, %v797
        %v830 = vpack.c.b16 %v798, %v798
        %v831 = vpack.c.b16 %v799, %v799
        %v832 = vpack.c.b16 %v800, %v800
        %v833 = vpack.c.b16 %v801, %v801
        %v834 = vpack.c.b16 %v802, %v802
        %v835 = vpack.c.b16 %v803, %v803
        %v836 = vpack.c.b16 %v804, %v804
        %v837 = vpack.c.b16 %v805, %v805
        %v838 = vpack.c.b16 %v806, %v806
        %v839 = vpack.c.b16 %v807, %v807
        %v840 = vpack.c.b16 %v808, %v808
        %v841 = vpack.c.b16 %v809, %v809
        %v842 = vpack.c.b16 %v810, %v810
        %v843 = vpack.c.b16 %v811, %v811
        %v844 = vpack.c.b16 %v812, %v812
        %v845 = vpack.c.b16 %v813, %v813
        %v846 = vpack.c.b16 %v814, %v814
        %879 = vst [vmem:[%s224] sm:$0xf] %v815
        %880 = vst [vmem:[%s224 + $0x4] sm:$0xf] %v816
        %881 = vst [vmem:[%s224 + $0x8] sm:$0xf] %v817
        %882 = vst [vmem:[%s224 + $0xc] sm:$0xf] %v818
        %883 = vst [vmem:[%s224 + $0x10] sm:$0xf] %v819
        %884 = vst [vmem:[%s224 + $0x14] sm:$0xf] %v820
        %885 = vst [vmem:[%s224 + $0x18] sm:$0xf] %v821
        %886 = vst [vmem:[%s224 + $0x1c] sm:$0xf] %v822
        %887 = vst [vmem:[%s224 + $0x20] sm:$0xf] %v823
        %888 = vst [vmem:[%s224 + $0x24] sm:$0xf] %v824
        %889 = vst [vmem:[%s224 + $0x28] sm:$0xf] %v825
        %890 = vst [vmem:[%s224 + $0x2c] sm:$0xf] %v826
        %891 = vst [vmem:[%s224 + $0x30] sm:$0xf] %v827
        %892 = vst [vmem:[%s224 + $0x34] sm:$0xf] %v828
        %893 = vst [vmem:[%s224 + $0x38] sm:$0xf] %v829
        %894 = vst [vmem:[%s224 + $0x3c] sm:$0xf] %v830
        %895 = vst [vmem:[%s224 + $0x40] sm:$0xf] %v831
        %896 = vst [vmem:[%s224 + $0x44] sm:$0xf] %v832
        %897 = vst [vmem:[%s224 + $0x48] sm:$0xf] %v833
        %898 = vst [vmem:[%s224 + $0x4c] sm:$0xf] %v834
        %899 = vst [vmem:[%s224 + $0x50] sm:$0xf] %v835
        %900 = vst [vmem:[%s224 + $0x54] sm:$0xf] %v836
        %901 = vst [vmem:[%s224 + $0x58] sm:$0xf] %v837
        %902 = vst [vmem:[%s224 + $0x5c] sm:$0xf] %v838
        %903 = vst [vmem:[%s224 + $0x60] sm:$0xf] %v839
        %904 = vst [vmem:[%s224 + $0x64] sm:$0xf] %v840
        %905 = vst [vmem:[%s224 + $0x68] sm:$0xf] %v841
        %906 = vst [vmem:[%s224 + $0x6c] sm:$0xf] %v842
        %907 = vst [vmem:[%s224 + $0x70] sm:$0xf] %v843
        %908 = vst [vmem:[%s224 + $0x74] sm:$0xf] %v844
        %909 = vst [vmem:[%s224 + $0x78] sm:$0xf] %v845
        %910 = vst [vmem:[%s224 + $0x7c] sm:$0xf] %v846
        %v911 = vadd.f32 %v719, %v720
        %v912 = vadd.f32 %v911, %v721
        %v913 = vadd.f32 %v912, %v722
        %v914 = vadd.f32 %v913, %v723
        %v915 = vadd.f32 %v914, %v724
        %v916 = vadd.f32 %v915, %v725
        %v917 = vadd.f32 %v916, %v726
        %v918 = vadd.f32 %v917, %v727
        %v919 = vadd.f32 %v918, %v728
        %v920 = vadd.f32 %v919, %v729
        %v921 = vadd.f32 %v920, %v730
        %v922 = vadd.f32 %v921, %v731
        %v923 = vadd.f32 %v922, %v732
        %v924 = vadd.f32 %v923, %v733
        %v925 = vadd.f32 %v924, %v734
        %v926 = vadd.f32 %v925, %v735
        %v927 = vadd.f32 %v926, %v736
        %v928 = vadd.f32 %v927, %v737
        %v929 = vadd.f32 %v928, %v738
        %v930 = vadd.f32 %v929, %v739
        %v931 = vadd.f32 %v930, %v740
        %v932 = vadd.f32 %v931, %v741
        %v933 = vadd.f32 %v932, %v742
        %v934 = vadd.f32 %v933, %v743
        %v935 = vadd.f32 %v934, %v744
        %v936 = vadd.f32 %v935, %v745
        %v937 = vadd.f32 %v936, %v746
        %v938 = vadd.f32 %v937, %v747
        %v939 = vadd.f32 %v938, %v748
        %v940 = vadd.f32 %v939, %v749
        %v941 = vadd.f32 %v940, %v750
        %v942 = vrot.slane %v941, 4
        %v943 = vadd.f32 %v941, %v942
        %v944 = vrot.slane %v943, 2
        %v945 = vadd.f32 %v943, %v944
        %v946 = vrot.slane %v945, 1
        %v947 = vadd.f32 %v945, %v946
        %948 = vst [vmem:[%s229] sm:$0x1] %v947
        %v949 = vmul.f32 %v719, %v719
        %v950 = vmul.f32 %v720, %v720
        %v951 = vmul.f32 %v721, %v721
        %v952 = vmul.f32 %v722, %v722
        %v953 = vmul.f32 %v723, %v723
        %v954 = vmul.f32 %v724, %v724
        %v955 = vmul.f32 %v725, %v725
        %v956 = vmul.f32 %v726, %v726
        %v957 = vmul.f32 %v727, %v727
        %v958 = vmul.f32 %v728, %v728
        %v959 = vmul.f32 %v729, %v729
        %v960 = vmul.f32 %v730, %v730
        %v961 = vmul.f32 %v731, %v731
        %v962 = vmul.f32 %v732, %v732
        %v963 = vmul.f32 %v733, %v733
        %v964 = vmul.f32 %v734, %v734
        %v965 = vmul.f32 %v735, %v735
        %v966 = vmul.f32 %v736, %v736
        %v967 = vmul.f32 %v737, %v737
        %v968 = vmul.f32 %v738, %v738
        %v969 = vmul.f32 %v739, %v739
        %v970 = vmul.f32 %v740, %v740
        %v971 = vmul.f32 %v741, %v741
        %v972 = vmul.f32 %v742, %v742
        %v973 = vmul.f32 %v743, %v743
        %v974 = vmul.f32 %v744, %v744
        %v975 = vmul.f32 %v745, %v745
        %v976 = vmul.f32 %v746, %v746
        %v977 = vmul.f32 %v747, %v747
        %v978 = vmul.f32 %v748, %v748
        %v979 = vmul.f32 %v749, %v749
        %v980 = vmul.f32 %v750, %v750
        %v981 = vadd.f32 %v949, %v950
        %v982 = vadd.f32 %v981, %v951
        %v983 = vadd.f32 %v982, %v952
        %v984 = vadd.f32 %v983, %v953
        %v985 = vadd.f32 %v984, %v954
        %v986 = vadd.f32 %v985, %v955
        %v987 = vadd.f32 %v986, %v956
        %v988 = vadd.f32 %v987, %v957
        %v989 = vadd.f32 %v988, %v958
        %v990 = vadd.f32 %v989, %v959
        %v991 = vadd.f32 %v990, %v960
        %v992 = vadd.f32 %v991, %v961
        %v993 = vadd.f32 %v992, %v962
        %v994 = vadd.f32 %v993, %v963
        %v995 = vadd.f32 %v994, %v964
        %v996 = vadd.f32 %v995, %v965
        %v997 = vadd.f32 %v996, %v966
        %v998 = vadd.f32 %v997, %v967
        %v999 = vadd.f32 %v998, %v968
        %v1000 = vadd.f32 %v999, %v969
        %v1001 = vadd.f32 %v1000, %v970
        %v1002 = vadd.f32 %v1001, %v971
        %v1003 = vadd.f32 %v1002, %v972
        %v1004 = vadd.f32 %v1003, %v973
        %v1005 = vadd.f32 %v1004, %v974
        %v1006 = vadd.f32 %v1005, %v975
        %v1007 = vadd.f32 %v1006, %v976
        %v1008 = vadd.f32 %v1007, %v977
        %v1009 = vadd.f32 %v1008, %v978
        %v1010 = vadd.f32 %v1009, %v979
        %v1011 = vadd.f32 %v1010, %v980
        %v1012 = vrot.slane %v1011, 4
        %v1013 = vadd.f32 %v1011, %v1012
        %v1014 = vrot.slane %v1013, 2
        %v1015 = vadd.f32 %v1013, %v1014
        %v1016 = vrot.slane %v1015, 1
        %v1017 = vadd.f32 %v1015, %v1016
        %1018 = vst [vmem:[%s229 + $0x1] sm:$0x1] %v1017
      $region36: #{up_forward.4} parent=27 // pred_fallthru
        _
      %s1019 = smul.u32 32, %s19
      %p1020 = scmp.lt.s32.totalorder %s1019, 63
      %s1021 = scalar_select %p1020, %s1019, 63
      %s1022 = smul.addr %s1021, 4
      %s1023 = scalar_lea.vmem %s2, %s1022
      %p1024 = scmp.lt.s32.totalorder %s19, 1
      %s1025 = scalar_select %p1024, %s19, 1
      %s1026 = smul.addr %s1025, 8
      %s1027 = scalar_lea.vmem %s3, %s1026
      // Predicated region
      $region37: #{up_forward.4} parent=27 // pred_check
        %p1028 = pneg %p99
      $region38: #{up_forward.4} parent=27 // pred_check_branch
        %1030 = sbr.rel (%p1028) target = $region40
      $region39: #{up_forward.4} parent=27 // pred_region
        %s1031 = smul.u32 32, %s19
      $region40: #{up_forward.4} parent=27 // pred_fallthru
        _
      // Predicated region
      $region41: #{up_forward.4} parent=27 // pred_check
        %p1032 = pneg %p125
      $region42: #{up_forward.4} parent=27 // pred_check_branch
        %1034 = sbr.rel (%p1032) target = $region44
      $region43: #{up_forward.4} parent=27 // pred_region
        _
      $region44: #{up_forward.4} parent=27 // pred_fallthru
        _
    $region28: #{up_forward.4} parent=5 // pred_fallthru
      _
    %p1035 = scmp.le.s32.totalorder 2, %s10
    // Predicated region
    $region45: #{up_forward.4} parent=5 // pred_check
      %p1036 = pneg %p1035
    $region46: #{up_forward.4} parent=5 // pred_check_branch
      %1038 = sbr.rel (%p1036) target = $region48
    $region47: #{up_forward.4} parent=5 // pred_region
      %s1039 = ssub.s32 %s10, 2
      // Predicated region
      $region49: #{up_forward.4} parent=47 // pred_check
        %p1040 = pneg %p105
      $region50: #{up_forward.4} parent=47 // pred_check_branch
        %1042 = sbr.rel (%p1040) target = $region52
      $region51: #{up_forward.4} parent=47 // pred_region
        %s1043 = smul.u32 32, %s21
        %p1044 = scmp.lt.s32.totalorder %s1043, 63
        %s1045 = scalar_select %p1044, %s1043, 63
        %s1046 = smul.addr %s1045, 4
        %s1047 = scalar_lea.vmem %s2, %s1046
      $region52: #{up_forward.4} parent=47 // pred_fallthru
        _
      // Predicated region
      $region53: #{up_forward.4} parent=47 // pred_check
        %p1048 = pneg %p131
      $region54: #{up_forward.4} parent=47 // pred_check_branch
        %1050 = sbr.rel (%p1048) target = $region56
      $region55: #{up_forward.4} parent=47 // pred_region
        %p1051 = scmp.lt.s32.totalorder %s21, 1
        %s1052 = scalar_select %p1051, %s21, 1
        %s1053 = smul.addr %s1052, 8
        %s1054 = scalar_lea.vmem %s3, %s1053
      $region56: #{up_forward.4} parent=47 // pred_fallthru
        _
    $region48: #{up_forward.4} parent=5 // pred_fallthru
      _
  $region6: #{up_forward.4} parent=0 // loop_footer
    %s14 = sadd.s32 1, %s10
  $region7: #{up_forward.4} parent=0 // loop_footer_branch
    %9 = sbr.rel target = $region3
  $region8: #{up_forward.4} parent=0 // loop_exit
    _

// kernel: up_forward.7
$region0: #{up_forward.7}
  #allocation0 [shape = 'u32[]', space=smem, size = 0x4, offset = 0x4, fixed_abs, tag = 'smem constant byte address 0x4 - core index']
  #allocation1 [shape = 'u32[144,128]{1,0:T(1,128)}', space=vmem, size = 0x12000, scoped, tag = 'internal scratch']
  %s0 = inlined_call_operand.vmem [shape: bf16[512,128], index: 0, kind: input, shape index: {}]
  %s1 = inlined_call_operand.vmem [shape: f32[1,128], index: 1, kind: input, shape index: {}]
  %s2 = inlined_call_operand.vmem [shape: f32[1,128], index: 2, kind: input, shape index: {}]
  %s3 = inlined_call_operand.vmem [shape: f32[512,128], index: 3, kind: output, shape index: {}]
  %s4 = sld [smem:[#allocation0]]
  $region45: #{up_forward.7} parent=0
    _
  %s6 = ssub.s32 1, %s4
  %s7 = scalar_select 0, %s6, %s4
  loop: start=0, step=1, limit=4
  $region2: #{up_forward.7} parent=0 // loop_pre_header
    _
  $region3: #{up_forward.7} parent=0 // loop_header
    %s9 = sphi 0, %s13
    %p10 = scmp.ge.s32.totalorder %s9, 4
    %s19 = sphi 0, %s21
    %s22 = sphi 0, %s19
    %s23 = sphi 0, %s22
    %s39 = sphi 0, %s23
    %s43 = sphi 0, %s43
    %s45 = sphi 0, %s43
    %s46 = sphi 0, %s45
    %s60 = sphi 0, %s46
    %s64 = sphi 0, %s64
    %s66 = sphi 0, %s64
    %s67 = sphi 0, %s66
    %s81 = sphi 0, %s67
    %s87 = sphi 0, %s89
    %s90 = sphi 0, %s87
    %s91 = sphi 0, %s90
    %s107 = sphi 0, %s91
  $region4: #{up_forward.7} parent=0 // loop_header_branch
    %12 = sbr.rel (%p10) target = $region8
  $region5: #{up_forward.7} parent=0 // loop_body
    %s14 = ssub.s32 %s9, 1
    %s15 = ssub.s32 %s9, 2
    %s16 = sadd.s32 %s9, 1
    %s17 = ssub.s32 %s9, %s16
    %p18 = scmp.eq.s32.totalorder %s17, 0
    %s20 = sadd.s32 %s19, 1
    %s21 = scalar_select %p18, %s19, %s20
    %p24 = pneg %p18
    %p25 = scmp.eq.s32.totalorder %s9, 1
    %p26 = por %p24, %p25
    %p27 = scmp.ne.s32.totalorder %s19, %s22
    %p28 = scmp.eq.s32.totalorder %s9, 0
    %p29 = por %p27, %p28
    %p30 = scmp.ne.s32.totalorder %s19, %s22
    %p31 = scmp.eq.s32.totalorder %s14, 1
    %p32 = por %p30, %p31
    %p33 = scmp.ne.s32.totalorder %s22, %s23
    %p34 = scmp.eq.s32.totalorder %s14, 0
    %p35 = por %p33, %p34
    %p36 = scmp.ne.s32.totalorder %s22, %s23
    %p37 = scmp.eq.s32.totalorder %s15, 1
    %p38 = por %p36, %p37
    %p40 = scmp.ne.s32.totalorder %s23, %s39
    %p41 = scmp.eq.s32.totalorder %s15, 0
    %p42 = por %p40, %p41
    %s44 = sadd.s32 %s43, 1
    %p47 = scmp.eq.s32.totalorder %s9, 1
    %p48 = scmp.ne.s32.totalorder %s43, %s45
    %p49 = scmp.eq.s32.totalorder %s9, 0
    %p50 = por %p48, %p49
    %p51 = scmp.ne.s32.totalorder %s43, %s45
    %p52 = scmp.eq.s32.totalorder %s14, 1
    %p53 = por %p51, %p52
    %p54 = scmp.ne.s32.totalorder %s45, %s46
    %p55 = scmp.eq.s32.totalorder %s14, 0
    %p56 = por %p54, %p55
    %p57 = scmp.ne.s32.totalorder %s45, %s46
    %p58 = scmp.eq.s32.totalorder %s15, 1
    %p59 = por %p57, %p58
    %p61 = scmp.ne.s32.totalorder %s46, %s60
    %p62 = scmp.eq.s32.totalorder %s15, 0
    %p63 = por %p61, %p62
    %s65 = sadd.s32 %s64, 1
    %p68 = scmp.eq.s32.totalorder %s9, 1
    %p69 = scmp.ne.s32.totalorder %s64, %s66
    %p70 = scmp.eq.s32.totalorder %s9, 0
    %p71 = por %p69, %p70
    %p72 = scmp.ne.s32.totalorder %s64, %s66
    %p73 = scmp.eq.s32.totalorder %s14, 1
    %p74 = por %p72, %p73
    %p75 = scmp.ne.s32.totalorder %s66, %s67
    %p76 = scmp.eq.s32.totalorder %s14, 0
    %p77 = por %p75, %p76
    %p78 = scmp.ne.s32.totalorder %s66, %s67
    %p79 = scmp.eq.s32.totalorder %s15, 1
    %p80 = por %p78, %p79
    %p82 = scmp.ne.s32.totalorder %s67, %s81
    %p83 = scmp.eq.s32.totalorder %s15, 0
    %p84 = por %p82, %p83
    %s85 = ssub.s32 %s9, %s16
    %p86 = scmp.eq.s32.totalorder %s85, 0
    %s88 = sadd.s32 %s87, 1
    %s89 = scalar_select %p86, %s87, %s88
    %p92 = pneg %p86
    %p93 = scmp.eq.s32.totalorder %s9, 1
    %p94 = por %p92, %p93
    %p95 = scmp.ne.s32.totalorder %s87, %s90
    %p96 = scmp.eq.s32.totalorder %s9, 0
    %p97 = por %p95, %p96
    %p98 = scmp.ne.s32.totalorder %s87, %s90
    %p99 = scmp.eq.s32.totalorder %s14, 1
    %p100 = por %p98, %p99
    %p101 = scmp.ne.s32.totalorder %s90, %s91
    %p102 = scmp.eq.s32.totalorder %s14, 0
    %p103 = por %p101, %p102
    %p104 = scmp.ne.s32.totalorder %s90, %s91
    %p105 = scmp.eq.s32.totalorder %s15, 1
    %p106 = por %p104, %p105
    %p108 = scmp.ne.s32.totalorder %s91, %s107
    %p109 = scmp.eq.s32.totalorder %s15, 0
    %p110 = por %p108, %p109
    %p111 = scmp.le.s32.totalorder 1, %s9
    %p112 = scmp.lt.s32.totalorder %s9, 3
    %p113 = pnand %p111, %p112
    %p114 = pneg %p113
    // Predicated region
    $region9: #{up_forward.7} parent=5 // pred_check
      _
    $region10: #{up_forward.7} parent=5 // pred_check_branch
      %116 = sbr.rel (%p113) target = $region12
    $region11: #{up_forward.7} parent=5 // pred_region
      %s117 = ssub.s32 %s9, 1
      // Predicated region
      $region13: #{up_forward.7} parent=11 // pred_check
        %p118 = pneg %p56
      $region14: #{up_forward.7} parent=11 // pred_check_branch
        %120 = sbr.rel (%p118) target = $region16
      $region15: #{up_forward.7} parent=11 // pred_region
        _
      $region16: #{up_forward.7} parent=11 // pred_fallthru
        _
      // Predicated region
      $region17: #{up_forward.7} parent=11 // pred_check
        %p121 = pneg %p77
      $region18: #{up_forward.7} parent=11 // pred_check_branch
        %123 = sbr.rel (%p121) target = $region20
      $region19: #{up_forward.7} parent=11 // pred_region
        _
      $region20: #{up_forward.7} parent=11 // pred_fallthru
        _
    $region12: #{up_forward.7} parent=5 // pred_fallthru
      _
    %p124 = scmp.lt.s32.totalorder %s9, 2
    // Predicated region
    $region21: #{up_forward.7} parent=5 // pred_check
      %p125 = pneg %p124
    $region22: #{up_forward.7} parent=5 // pred_check_branch
      %127 = sbr.rel (%p125) target = $region24
    $region23: #{up_forward.7} parent=5 // pred_region
      // Predicated region
      $region25: #{up_forward.7} parent=23 // pred_check
        %p128 = pneg %p29
      $region26: #{up_forward.7} parent=23 // pred_check_branch
        %130 = sbr.rel (%p128) target = $region28
      $region27: #{up_forward.7} parent=23 // pred_region
        %s131 = smul.u32 32, %s9
        %p132 = scmp.lt.s32.totalorder %s131, 63
        %s133 = scalar_select %p132, %s131, 63
        %s134 = smul.addr %s133, 4
        %s135 = scalar_lea.vmem %s0, %s134
        %s136 = smul.u32 32, %s9
      $region28: #{up_forward.7} parent=23 // pred_fallthru
        _
    $region24: #{up_forward.7} parent=5 // pred_fallthru
      _
    %p137 = scmp.le.s32.totalorder 1, %s9
    %p138 = scmp.lt.s32.totalorder %s9, 3
    %p139 = pnand %p137, %p138
    %p140 = pneg %p139
    // Predicated region
    $region29: #{up_forward.7} parent=5 // pred_check
      _
    $region30: #{up_forward.7} parent=5 // pred_check_branch
      %142 = sbr.rel (%p139) target = $region32
    $region31: #{up_forward.7} parent=5 // pred_region
      %s143 = ssub.s32 %s9, 1
      %s144 = smul.u32 32, %s14
      %p145 = scmp.lt.s32.totalorder %s144, 63
      %s146 = scalar_select %p145, %s144, 63
      %s147 = smul.addr %s146, 4
      %s148 = scalar_lea.vmem %s0, %s147
      %p149 = pneg %p35
      %p150 = pneg %p32
      %p151 = pneg %p56
      %p152 = pneg %p53
      %p153 = pneg %p77
      %p154 = pneg %p74
      %p155 = pneg %p103
      %p156 = pneg %p100
      %s157 = smul.u32 32, %s14
      %p158 = scmp.lt.s32.totalorder %s157, 63
      %s159 = scalar_select %p158, %s157, 63
      %s160 = smul.addr %s159, 8
      %s161 = scalar_lea.vmem %s3, %s160
      %s162 = smul.u32 32, %s14
      %p163 = scmp.lt.s32.totalorder %s162, 63
      %s164 = scalar_select %p163, %s162, 63
      %s165 = smul.addr %s164, 4
      %s166 = scalar_lea.vmem %s0, %s165
      %s167 = smul.u32 32, %s14
      %s168 = smul.u32 32, %s14
      %p169 = scmp.lt.s32.totalorder %s168, 63
      %s170 = scalar_select %p169, %s168, 63
      %s171 = smul.addr %s170, 8
      %s172 = scalar_lea.vmem %s3, %s171
      %s173 = smul.u32 32, %s14
      %v174 = vld [vmem:[%s166] sm:$0xf]
      %v175 = vld [vmem:[%s166 + $0x4] sm:$0xf]
      %v176 = vld [vmem:[%s166 + $0x8] sm:$0xf]
      %v177 = vld [vmem:[%s166 + $0xc] sm:$0xf]
      %v178 = vld [vmem:[%s166 + $0x10] sm:$0xf]
      %v179 = vld [vmem:[%s166 + $0x14] sm:$0xf]
      %v180 = vld [vmem:[%s166 + $0x18] sm:$0xf]
      %v181 = vld [vmem:[%s166 + $0x1c] sm:$0xf]
      %v182 = vld [vmem:[%s166 + $0x20] sm:$0xf]
      %v183 = vld [vmem:[%s166 + $0x24] sm:$0xf]
      %v184 = vld [vmem:[%s166 + $0x28] sm:$0xf]
      %v185 = vld [vmem:[%s166 + $0x2c] sm:$0xf]
      %v186 = vld [vmem:[%s166 + $0x30] sm:$0xf]
      %v187 = vld [vmem:[%s166 + $0x34] sm:$0xf]
      %v188 = vld [vmem:[%s166 + $0x38] sm:$0xf]
      %v189 = vld [vmem:[%s166 + $0x3c] sm:$0xf]
      %v190 = vld [vmem:[%s166 + $0x40] sm:$0xf]
      %v191 = vld [vmem:[%s166 + $0x44] sm:$0xf]
      %v192 = vld [vmem:[%s166 + $0x48] sm:$0xf]
      %v193 = vld [vmem:[%s166 + $0x4c] sm:$0xf]
      %v194 = vld [vmem:[%s166 + $0x50] sm:$0xf]
      %v195 = vld [vmem:[%s166 + $0x54] sm:$0xf]
      %v196 = vld [vmem:[%s166 + $0x58] sm:$0xf]
      %v197 = vld [vmem:[%s166 + $0x5c] sm:$0xf]
      %v198 = vld [vmem:[%s166 + $0x60] sm:$0xf]
      %v199 = vld [vmem:[%s166 + $0x64] sm:$0xf]
      %v200 = vld [vmem:[%s166 + $0x68] sm:$0xf]
      %v201 = vld [vmem:[%s166 + $0x6c] sm:$0xf]
      %v202 = vld [vmem:[%s166 + $0x70] sm:$0xf]
      %v203 = vld [vmem:[%s166 + $0x74] sm:$0xf]
      %v204 = vld [vmem:[%s166 + $0x78] sm:$0xf]
      %v205 = vld [vmem:[%s166 + $0x7c] sm:$0xf]
      %v206 = vunpack.c.l.bf16 %v174
      %v207 = vunpack.c.l.bf16 %v175
      %v208 = vunpack.c.l.bf16 %v176
      %v209 = vunpack.c.l.bf16 %v177
      %v210 = vunpack.c.l.bf16 %v178
      %v211 = vunpack.c.l.bf16 %v179
      %v212 = vunpack.c.l.bf16 %v180
      %v213 = vunpack.c.l.bf16 %v181
      %v214 = vunpack.c.l.bf16 %v182
      %v215 = vunpack.c.l.bf16 %v183
      %v216 = vunpack.c.l.bf16 %v184
      %v217 = vunpack.c.l.bf16 %v185
      %v218 = vunpack.c.l.bf16 %v186
      %v219 = vunpack.c.l.bf16 %v187
      %v220 = vunpack.c.l.bf16 %v188
      %v221 = vunpack.c.l.bf16 %v189
      %v222 = vunpack.c.l.bf16 %v190
      %v223 = vunpack.c.l.bf16 %v191
      %v224 = vunpack.c.l.bf16 %v192
      %v225 = vunpack.c.l.bf16 %v193
      %v226 = vunpack.c.l.bf16 %v194
      %v227 = vunpack.c.l.bf16 %v195
      %v228 = vunpack.c.l.bf16 %v196
      %v229 = vunpack.c.l.bf16 %v197
      %v230 = vunpack.c.l.bf16 %v198
      %v231 = vunpack.c.l.bf16 %v199
      %v232 = vunpack.c.l.bf16 %v200
      %v233 = vunpack.c.l.bf16 %v201
      %v234 = vunpack.c.l.bf16 %v202
      %v235 = vunpack.c.l.bf16 %v203
      %v236 = vunpack.c.l.bf16 %v204
      %v237 = vunpack.c.l.bf16 %v205
      %v238 = vld [vmem:[%s1] sm:$0x1]
      %v240 = vlaneseq
      %v241 = vshrl.u32 %v240, 7
      %v242 = vsub.s32 0, %v241
      %v243 = vrot.slane %v238, %v242
      %v245 = vmul.f32 %v206, %v243
      %v246 = vmul.f32 %v207, %v243
      %v247 = vmul.f32 %v208, %v243
      %v248 = vmul.f32 %v209, %v243
      %v249 = vmul.f32 %v210, %v243
      %v250 = vmul.f32 %v211, %v243
      %v251 = vmul.f32 %v212, %v243
      %v252 = vmul.f32 %v213, %v243
      %v253 = vmul.f32 %v214, %v243
      %v254 = vmul.f32 %v215, %v243
      %v255 = vmul.f32 %v216, %v243
      %v256 = vmul.f32 %v217, %v243
      %v257 = vmul.f32 %v218, %v243
      %v258 = vmul.f32 %v219, %v243
      %v259 = vmul.f32 %v220, %v243
      %v260 = vmul.f32 %v221, %v243
      %v261 = vmul.f32 %v222, %v243
      %v262 = vmul.f32 %v223, %v243
      %v263 = vmul.f32 %v224, %v243
      %v264 = vmul.f32 %v225, %v243
      %v265 = vmul.f32 %v226, %v243
      %v266 = vmul.f32 %v227, %v243
      %v267 = vmul.f32 %v228, %v243
      %v268 = vmul.f32 %v229, %v243
      %v269 = vmul.f32 %v230, %v243
      %v270 = vmul.f32 %v231, %v243
      %v271 = vmul.f32 %v232, %v243
      %v272 = vmul.f32 %v233, %v243
      %v273 = vmul.f32 %v234, %v243
      %v274 = vmul.f32 %v235, %v243
      %v275 = vmul.f32 %v236, %v243
      %v276 = vmul.f32 %v237, %v243
      %v277 = vld [vmem:[%s2] sm:$0x1]
      %v279 = vlaneseq
      %v280 = vshrl.u32 %v279, 7
      %v281 = vsub.s32 0, %v280
      %v282 = vrot.slane %v277, %v281
      %v284 = vadd.f32 %v245, %v282
      %v285 = vadd.f32 %v246, %v282
      %v286 = vadd.f32 %v247, %v282
      %v287 = vadd.f32 %v248, %v282
      %v288 = vadd.f32 %v249, %v282
      %v289 = vadd.f32 %v250, %v282
      %v290 = vadd.f32 %v251, %v282
      %v291 = vadd.f32 %v252, %v282
      %v292 = vadd.f32 %v253, %v282
      %v293 = vadd.f32 %v254, %v282
      %v294 = vadd.f32 %v255, %v282
      %v295 = vadd.f32 %v256, %v282
      %v296 = vadd.f32 %v257, %v282
      %v297 = vadd.f32 %v258, %v282
      %v298 = vadd.f32 %v259, %v282
      %v299 = vadd.f32 %v260, %v282
      %v300 = vadd.f32 %v261, %v282
      %v301 = vadd.f32 %v262, %v282
      %v302 = vadd.f32 %v263, %v282
      %v303 = vadd.f32 %v264, %v282
      %v304 = vadd.f32 %v265, %v282
      %v305 = vadd.f32 %v266, %v282
      %v306 = vadd.f32 %v267, %v282
      %v307 = vadd.f32 %v268, %v282
      %v308 = vadd.f32 %v269, %v282
      %v309 = vadd.f32 %v270, %v282
      %v310 = vadd.f32 %v271, %v282
      %v311 = vadd.f32 %v272, %v282
      %v312 = vadd.f32 %v273, %v282
      %v313 = vadd.f32 %v274, %v282
      %v314 = vadd.f32 %v275, %v282
      %v315 = vadd.f32 %v276, %v282
      %v316 = vmax.f32 %v284, 0.0
      %v317 = vmax.f32 %v285, 0.0
      %v318 = vmax.f32 %v286, 0.0
      %v319 = vmax.f32 %v287, 0.0
      %v320 = vmax.f32 %v288, 0.0
      %v321 = vmax.f32 %v289, 0.0
      %v322 = vmax.f32 %v290, 0.0
      %v323 = vmax.f32 %v291, 0.0
      %v324 = vmax.f32 %v292, 0.0
      %v325 = vmax.f32 %v293, 0.0
      %v326 = vmax.f32 %v294, 0.0
      %v327 = vmax.f32 %v295, 0.0
      %v328 = vmax.f32 %v296, 0.0
      %v329 = vmax.f32 %v297, 0.0
      %v330 = vmax.f32 %v298, 0.0
      %v331 = vmax.f32 %v299, 0.0
      %v332 = vmax.f32 %v300, 0.0
      %v333 = vmax.f32 %v301, 0.0
      %v334 = vmax.f32 %v302, 0.0
      %v335 = vmax.f32 %v303, 0.0
      %v336 = vmax.f32 %v304, 0.0
      %v337 = vmax.f32 %v305, 0.0
      %v338 = vmax.f32 %v306, 0.0
      %v339 = vmax.f32 %v307, 0.0
      %v340 = vmax.f32 %v308, 0.0
      %v341 = vmax.f32 %v309, 0.0
      %v342 = vmax.f32 %v310, 0.0
      %v343 = vmax.f32 %v311, 0.0
      %v344 = vmax.f32 %v312, 0.0
      %v345 = vmax.f32 %v313, 0.0
      %v346 = vmax.f32 %v314, 0.0
      %v347 = vmax.f32 %v315, 0.0
      %348 = vst [vmem:[%s172] sm:$0xff] %v316
      %349 = vst [vmem:[%s172 + $0x8] sm:$0xff] %v317
      %350 = vst [vmem:[%s172 + $0x10] sm:$0xff] %v318
      %351 = vst [vmem:[%s172 + $0x18] sm:$0xff] %v319
      %352 = vst [vmem:[%s172 + $0x20] sm:$0xff] %v320
      %353 = vst [vmem:[%s172 + $0x28] sm:$0xff] %v321
      %354 = vst [vmem:[%s172 + $0x30] sm:$0xff] %v322
      %355 = vst [vmem:[%s172 + $0x38] sm:$0xff] %v323
      %356 = vst [vmem:[%s172 + $0x40] sm:$0xff] %v324
      %357 = vst [vmem:[%s172 + $0x48] sm:$0xff] %v325
      %358 = vst [vmem:[%s172 + $0x50] sm:$0xff] %v326
      %359 = vst [vmem:[%s172 + $0x58] sm:$0xff] %v327
      %360 = vst [vmem:[%s172 + $0x60] sm:$0xff] %v328
      %361 = vst [vmem:[%s172 + $0x68] sm:$0xff] %v329
      %362 = vst [vmem:[%s172 + $0x70] sm:$0xff] %v330
      %363 = vst [vmem:[%s172 + $0x78] sm:$0xff] %v331
      %364 = vst [vmem:[%s172 + $0x80] sm:$0xff] %v332
      %365 = vst [vmem:[%s172 + $0x88] sm:$0xff] %v333
      %366 = vst [vmem:[%s172 + $0x90] sm:$0xff] %v334
      %367 = vst [vmem:[%s172 + $0x98] sm:$0xff] %v335
      %368 = vst [vmem:[%s172 + $0xa0] sm:$0xff] %v336
      %369 = vst [vmem:[%s172 + $0xa8] sm:$0xff] %v337
      %370 = vst [vmem:[%s172 + $0xb0] sm:$0xff] %v338
      %371 = vst [vmem:[%s172 + $0xb8] sm:$0xff] %v339
      %372 = vst [vmem:[%s172 + $0xc0] sm:$0xff] %v340
      %373 = vst [vmem:[%s172 + $0xc8] sm:$0xff] %v341
      %374 = vst [vmem:[%s172 + $0xd0] sm:$0xff] %v342
      %375 = vst [vmem:[%s172 + $0xd8] sm:$0xff] %v343
      %376 = vst [vmem:[%s172 + $0xe0] sm:$0xff] %v344
      %377 = vst [vmem:[%s172 + $0xe8] sm:$0xff] %v345
      %378 = vst [vmem:[%s172 + $0xf0] sm:$0xff] %v346
      %379 = vst [vmem:[%s172 + $0xf8] sm:$0xff] %v347
      %s380 = smul.u32 32, %s14
      %p381 = scmp.lt.s32.totalorder %s380, 63
      %s382 = scalar_select %p381, %s380, 63
      %s383 = smul.addr %s382, 8
      %s384 = scalar_lea.vmem %s3, %s383
      // Predicated region
      $region33: #{up_forward.7} parent=31 // pred_check
        %p385 = pneg %p100
      $region34: #{up_forward.7} parent=31 // pred_check_branch
        %387 = sbr.rel (%p385) target = $region36
      $region35: #{up_forward.7} parent=31 // pred_region
        %s388 = smul.u32 32, %s14
      $region36: #{up_forward.7} parent=31 // pred_fallthru
        _
    $region32: #{up_forward.7} parent=5 // pred_fallthru
      _
    %p389 = scmp.le.s32.totalorder 2, %s9
    // Predicated region
    $region37: #{up_forward.7} parent=5 // pred_check
      %p390 = pneg %p389
    $region38: #{up_forward.7} parent=5 // pred_check_branch
      %392 = sbr.rel (%p390) target = $region40
    $region39: #{up_forward.7} parent=5 // pred_region
      %s393 = ssub.s32 %s9, 2
      // Predicated region
      $region41: #{up_forward.7} parent=39 // pred_check
        %p394 = pneg %p106
      $region42: #{up_forward.7} parent=39 // pred_check_branch
        %396 = sbr.rel (%p394) target = $region44
      $region43: #{up_forward.7} parent=39 // pred_region
        %s397 = smul.u32 32, %s15
        %p398 = scmp.lt.s32.totalorder %s397, 63
        %s399 = scalar_select %p398, %s397, 63
        %s400 = smul.addr %s399, 8
        %s401 = scalar_lea.vmem %s3, %s400
      $region44: #{up_forward.7} parent=39 // pred_fallthru
        _
    $region40: #{up_forward.7} parent=5 // pred_fallthru
      _
  $region6: #{up_forward.7} parent=0 // loop_footer
    %s13 = sadd.s32 1, %s9
  $region7: #{up_forward.7} parent=0 // loop_footer_branch
    %8 = sbr.rel target = $region3
  $region8: #{up_forward.7} parent=0 // loop_exit
    _

</llo_original>
